<compile_context>
chip_gen: v7x
topology: tpu7x:2x2x1
jax: 0.10.0
libtpu: 0.0.40
codegen_flags: <defaults>
</compile_context>

<pallas_src>
import functools
import math

import numpy as np
import jax
import jax.numpy as jnp
from jax import lax
from jax.experimental import pallas as pl
from jax.experimental.pallas import tpu as pltpu


# ----------------------------------------------------------------------------
# numerically stable softplus (valid for the huge negative masked logits too)
# ----------------------------------------------------------------------------
def _softplus(x):
    return jnp.maximum(x, 0.0) + jnp.log(1.0 + jnp.exp(-jnp.abs(x)))


# ----------------------------------------------------------------------------
# in-kernel digamma — valid for x >= 1 (holds: alpha = softplus(.)+1 >= 1,
# S = sum_c alpha >= C).  Recurrence pushes the argument to >= 7, then the
# asymptotic series.  All divides go through the EUP approx reciprocal.
# ----------------------------------------------------------------------------
def _digamma(x):
    acc = jnp.zeros_like(x)
    y = x
    for _ in range(6):
        small = y < 7.0
        acc = acc - jnp.where(small, pl.reciprocal(y, approx=True), 0.0)
        y = jnp.where(small, y + 1.0, y)
    inv = pl.reciprocal(y, approx=True)
    inv2 = inv * inv
    series = inv2 * (1.0 / 12.0 - inv2 * (1.0 / 120.0 - inv2 * (1.0 / 252.0)))
    return jnp.log(y) - 0.5 * inv - series + acc


def _sum_all(x):
    """Reduce a 2-D/3-D array to (1, 1): lane reduce then sublane reduce (both
    keepdims -> robust Mosaic lowering), then a static loop over leading dims."""
    x = jnp.sum(x, axis=-1, keepdims=True)
    x = jnp.sum(x, axis=-2, keepdims=True)
    if x.ndim == 3:
        t = x[0]
        for i in range(1, x.shape[0]):
            t = t + x[i]
        return t
    return x


# ----------------------------------------------------------------------------
# Fused SetCriterion kernel (single invocation, no grid — everything fits VMEM)
#   logits_ref : (B, C, Q)   pred_logits, class on sublanes / query on lanes
#   cmask_ref  : (1, C, 1)   additive invalid-class mask (0 or -1e11), constant
#   tgt_ref    : (B, 1, NT)  int32 target class per matched query
#   pbox_ref   : (B, Q, 4)   raw predicted boxes (cxcywh)
#   tbox_ref   : (B, NT, 4)  target boxes (cxcywh)
#   obj_ref    : (B, Q)      raw predicted objectness
#   out_ref    : (1, 8)      lanes: [loss_ce, class_error, cardinality_error,
#                                    loss_bbox, loss_giou, loss_obj_ll, 0, 0]
# ----------------------------------------------------------------------------
def criterion_kernel(logits_ref, cmask_ref, tgt_ref, pbox_ref, tbox_ref,
                     obj_ref, out_ref, *,
                     num_targets, min_obj, inv_bq, inv_b, inv_num_boxes,
                     inv_matched):
    B, C, Q = logits_ref.shape
    NT = num_targets

    logits = logits_ref[...].astype(jnp.float32)        # in-kernel upcast (bf16-safe)
    cmask = cmask_ref[...]                              # (1, C, 1)

    cls_iota = lax.broadcasted_iota(jnp.int32, (B, C, Q), 1)
    is_bg = cls_iota == (C - 1)

    # ---- cardinality error (raw logits): argmax != background  <=>
    #      max over foreground classes >= background logit (bg is last class) ----
    logit_bg = jnp.sum(jnp.where(is_bg, logits, 0.0), axis=1, keepdims=True)    # (B,1,Q)
    max_fg = jnp.max(jnp.where(is_bg, -1e30, logits), axis=1, keepdims=True)    # (B,1,Q)
    card_q = (max_fg >= logit_bg).astype(jnp.float32)                           # (B,1,Q)
    card_img = jnp.sum(card_q, axis=-1, keepdims=True)                          # (B,1,1)
    err_img = jnp.abs(card_img - float(NT))
    card_err = err_img[0]
    for bi in range(1, B):
        card_err = card_err + err_img[bi]
    card_err = card_err * inv_b                                                  # (1,1)

    # ---- EDL label loss, background part over ALL queries (lane-dense) ----
    ml = logits + cmask                                  # invalid classes -> ~-1e11
    alpha = _softplus(ml) + 1.0                                                  # (B,C,Q)
    S = jnp.sum(alpha, axis=1, keepdims=True)                                    # (B,1,Q)
    alpha_bg = jnp.sum(jnp.where(is_bg, alpha, 0.0), axis=1, keepdims=True)      # (B,1,Q)

    # one digamma call over [S ; alpha_bg] packed along sublanes
    pick = lax.broadcasted_iota(jnp.int32, (B, 2, Q), 1) == 0
    d = _digamma(jnp.where(pick, S, alpha_bg))                                   # (B,2,Q)
    sign = jnp.where(pick, 1.0, -1.0)
    base_sum = _sum_all(d * sign)            # = sum(dig(S)) - sum(dig(alpha_bg))

    # ---- matched-slice correction + class_error (first NT queries only) ----
    lm = logits_ref[:, :, pl.ds(0, NT)].astype(jnp.float32)                      # (B,C,NT)
    alpham = _softplus(lm + cmask) + 1.0
    iota_m = lax.broadcasted_iota(jnp.int32, (B, C, NT), 1)
    tgt = tgt_ref[...]                                                           # (B,1,NT) int32
    alpha_lab = jnp.sum(jnp.where(iota_m == tgt, alpham, 0.0),
                        axis=1, keepdims=True)                                   # (B,1,NT)
    alpha_bgm = jnp.sum(jnp.where(iota_m == (C - 1), alpham, 0.0),
                        axis=1, keepdims=True)                                   # (B,1,NT)

    pick_m = lax.broadcasted_iota(jnp.int32, (B, 2, NT), 1) == 0
    dm = _digamma(jnp.where(pick_m, alpha_bgm, alpha_lab))                       # (B,2,NT)
    sign_m = jnp.where(pick_m, 1.0, -1.0)
    corr_sum = _sum_all(dm * sign_m)         # sum_matched dig(a_bg) - dig(a_label)

    loss_ce = (base_sum + corr_sum) * inv_bq                                     # (1,1)

    # class_error: masked-logit argmax == label  <=>  alpha at label is the max
    # (softplus is strictly monotone, so alpha ordering == masked-logit ordering)
    alpha_maxm = jnp.max(alpham, axis=1, keepdims=True)                          # (B,1,NT)
    correct = (alpha_lab >= alpha_maxm).astype(jnp.float32)
    class_error = 100.0 - _sum_all(correct) * (100.0 * inv_matched)              # (1,1)

    # ---- matched-box L1 + GIoU losses (identity matching: first NT queries) ----
    src = pbox_ref[:, pl.ds(0, NT), :].astype(jnp.float32)                       # (B,NT,4)
    tgb = tbox_ref[...].astype(jnp.float32)                                      # (B,NT,4)
    loss_bbox = _sum_all(jnp.abs(src - tgb)) * inv_num_boxes                     # (1,1)

    lane4 = lax.broadcasted_iota(jnp.int32, (B, NT, 4), 2)

    def coord(box, i):
        # extract coordinate i as a (B, NT, 1) column via a masked lane reduce
        return jnp.sum(jnp.where(lane4 == i, box, 0.0), axis=-1, keepdims=True)

    scx, scy, sw, sh = coord(src, 0), coord(src, 1), coord(src, 2), coord(src, 3)
    tcx, tcy, tw, th = coord(tgb, 0), coord(tgb, 1), coord(tgb, 2), coord(tgb, 3)
    sx0, sy0, sx1, sy1 = scx - 0.5 * sw, scy - 0.5 * sh, scx + 0.5 * sw, scy + 0.5 * sh
    tx0, ty0, tx1, ty1 = tcx - 0.5 * tw, tcy - 0.5 * th, tcx + 0.5 * tw, tcy + 0.5 * th

    area_s = (sx1 - sx0) * (sy1 - sy0)
    area_t = (tx1 - tx0) * (ty1 - ty0)
    iw = jnp.maximum(jnp.minimum(sx1, tx1) - jnp.maximum(sx0, tx0), 0.0)
    ih = jnp.maximum(jnp.minimum(sy1, ty1) - jnp.maximum(sy0, ty0), 0.0)
    inter = iw * ih
    union = area_s + area_t - inter
    # tiny arrays: keep exact divides here (review correctness concern on approx recip)
    iou = inter / jnp.maximum(union, 1e-7)
    ew = jnp.maximum(jnp.maximum(sx1, tx1) - jnp.minimum(sx0, tx0), 0.0)
    eh = jnp.maximum(jnp.maximum(sy1, ty1) - jnp.minimum(sy0, ty0), 0.0)
    earea = ew * eh
    giou = iou - (earea - union) / jnp.maximum(earea, 1e-7)
    loss_giou = _sum_all(1.0 - giou) * inv_num_boxes                             # (1,1)

    # ---- objectness-likelihood loss (clamp then mask to matched queries) ----
    obj = obj_ref[...].astype(jnp.float32)                                       # (B,Q)
    q_iota = lax.broadcasted_iota(jnp.int32, (B, Q), 1)
    obj_c = jnp.where(q_iota < NT, jnp.maximum(obj, min_obj), 0.0)
    loss_obj = _sum_all(obj_c) * inv_num_boxes                                   # (1,1)

    # ---- pack the six scalar losses lane-wise into one small store ----
    lane = lax.broadcasted_iota(jnp.int32, (1, 8), 1)
    packed = jnp.where(lane == 0, loss_ce, jnp.zeros((1, 8), jnp.float32))
    packed = jnp.where(lane == 1, class_error, packed)
    packed = jnp.where(lane == 2, card_err, packed)
    packed = jnp.where(lane == 3, loss_bbox, packed)
    packed = jnp.where(lane == 4, loss_giou, packed)
    packed = jnp.where(lane == 5, loss_obj, packed)
    out_ref[...] = packed


# ----------------------------------------------------------------------------
# Wrapper: full SetCriterion forward (losses = labels, cardinality, boxes,
# obj_likelihood) as ONE fused Pallas call.  Only one real wrapper op remains:
# the (B,Q,C)->(B,C,Q) transpose that gives the lane-dense class/query layout.
# ----------------------------------------------------------------------------
@functools.partial(jax.jit, static_argnames=("invalid_cls_logits", "hidden_dim"))
def set_criterion_forward(pred_logits, pred_boxes, pred_obj, tgt_labels, tgt_boxes,
                          *, invalid_cls_logits, hidden_dim):
    B, Q, C = pred_logits.shape
    NT = tgt_labels.shape[1]                 # targets per image (fixed, synthetic)
    min_obj = -hidden_dim * math.log(0.9)

    # identity matching (see TODO(synk) in header): src_idx = tgt_idx = arange(NT)
    N = B * NT
    num_boxes = max(float(N), 1.0)           # TODO(synk): no distributed all_reduce

    # single lane-layout transform on the dominant tensor (class->sublane, query->lane)
    logits_t = jnp.transpose(pred_logits, (0, 2, 1))                # (B, C, Q)

    # compile-time additive invalid-class mask (numpy constant, no runtime op)
    cmask = np.zeros((1, C, 1), np.float32)
    if len(invalid_cls_logits):
        cmask[0, list(invalid_cls_logits), 0] = -1e11

    # metadata-only reshape of the tiny label tensor
    tgt_cls = tgt_labels.astype(jnp.int32).reshape(B, 1, NT)

    kernel = functools.partial(
        criterion_kernel,
        num_targets=NT,
        min_obj=float(min_obj),
        inv_bq=1.0 / float(B * Q),
        inv_b=1.0 / float(B),
        inv_num_boxes=1.0 / num_boxes,
        inv_matched=1.0 / float(max(N, 1)),
    )

    vmem = pl.BlockSpec(memory_space=pltpu.MemorySpace.VMEM)
    cost = pl.CostEstimate(
        flops=int(20 * B * Q * C + 150 * B * Q + 400 * B * NT),
        transcendentals=int(2 * B * Q * C + 20 * B * Q + 20 * B * NT),
        bytes_accessed=int(4 * (B * Q * C + 5 * B * Q + 9 * B * NT + C) + 32),
    )

    sums = pl.pallas_call(
        kernel,
        out_shape=jax.ShapeDtypeStruct((1, 8), jnp.float32),
        in_specs=[vmem, vmem, vmem, vmem, vmem, vmem],
        out_specs=vmem,
        cost_estimate=cost,
    )(logits_t, jnp.asarray(cmask), tgt_cls, pred_boxes, tgt_boxes, pred_obj)

    return {
        "loss_ce": sums[0, 0],
        "class_error": sums[0, 1],
        "cardinality_error": sums[0, 2],
        "loss_bbox": sums[0, 3],
        "loss_giou": sums[0, 4],
        "loss_obj_ll": sums[0, 5],
    }


if __name__ == "__main__":
    B, Q, C = 2, 16, 8          # batch, queries, num_classes
    NT = 3                      # targets per image (synthetic, fixed)
    HIDDEN = 32
    INVALID_CLS = (C - 2,)      # one invalid class logit

    key = jax.random.PRNGKey(0)
    k1, k2, k3, k4, k5, k6 = jax.random.split(key, 6)

    pred_logits = jax.random.normal(k1, (B, Q, C), jnp.float32)
    pred_boxes = jax.nn.sigmoid(jax.random.normal(k2, (B, Q, 4), jnp.float32))
    pred_obj = jax.random.normal(k3, (B, Q), jnp.float32) * 5.0

    tgt_labels = jax.random.randint(k4, (B, NT), 0, C - 2)            # valid fg classes
    cxy = 0.25 + 0.5 * jax.random.uniform(k5, (B, NT, 2), jnp.float32)
    wh = 0.1 + 0.3 * jax.random.uniform(k6, (B, NT, 2), jnp.float32)
    tgt_boxes = jnp.concatenate([cxy, wh], axis=-1)

    losses = set_criterion_forward(
        pred_logits, pred_boxes, pred_obj, tgt_labels, tgt_boxes,
        invalid_cls_logits=INVALID_CLS, hidden_dim=HIDDEN)

    losses = jax.tree_util.tree_map(jax.block_until_ready, losses)
    for k, v in losses.items():
        assert jnp.isfinite(v), f"non-finite loss {k}: {v}"
    print("KERNEL_OK")
</pallas_src>

<mosaic_0001>
module attributes {stable_mosaic.version = 11 : i64} {
  func.func @criterion_kernel(%arg0: memref<2x8x16xf32, #tpu.memory_space<vmem>>, %arg1: memref<1x8x1xf32, #tpu.memory_space<vmem>>, %arg2: memref<2x1x3xi32, #tpu.memory_space<vmem>>, %arg3: memref<2x16x4xf32, #tpu.memory_space<vmem>>, %arg4: memref<2x3x4xf32, #tpu.memory_space<vmem>>, %arg5: memref<2x16xf32, #tpu.memory_space<vmem>>, %arg6: memref<1x8xf32, #tpu.memory_space<vmem>>) attributes {dimension_semantics = [], scalar_prefetch = 0 : i64, scratch_operands = 0 : i64, tpu.core_type = #tpu.core_type<tc>} {
    %c0 = arith.constant 0 : index
    %c0_0 = arith.constant 0 : index
    %c0_1 = arith.constant 0 : index
    %0 = vector.load %arg0[%c0, %c0_0, %c0_1] : memref<2x8x16xf32, #tpu.memory_space<vmem>>, vector<2x8x16xf32>
    %c0_2 = arith.constant 0 : index
    %c0_3 = arith.constant 0 : index
    %c0_4 = arith.constant 0 : index
    %1 = vector.load %arg1[%c0_2, %c0_3, %c0_4] : memref<1x8x1xf32, #tpu.memory_space<vmem>>, vector<1x8x1xf32>
    %2 = tpu.iota {dimensions = array<i32: 1>} : vector<2x8x16xi32>
    %c7_i32 = arith.constant 7 : i32
    %3 = vector.broadcast %c7_i32 : i32 to vector<2x8x16xi32>
    %4 = arith.cmpi eq, %2, %3 : vector<2x8x16xi32>
    %cst = arith.constant 0.000000e+00 : f32
    %5 = vector.broadcast %cst : f32 to vector<2x8x16xf32>
    %6 = arith.select %4, %0, %5 : vector<2x8x16xi1>, vector<2x8x16xf32>
    %cst_5 = arith.constant dense<0.000000e+00> : vector<2x16xf32>
    %7 = vector.multi_reduction <add>, %6, %cst_5 [1] : vector<2x8x16xf32> to vector<2x16xf32>
    %8 = vector.shape_cast %7 : vector<2x16xf32> to vector<2x1x16xf32>
    %cst_6 = arith.constant -1.000000e+30 : f32
    %9 = vector.broadcast %cst_6 : f32 to vector<2x8x16xf32>
    %10 = arith.select %4, %9, %0 : vector<2x8x16xi1>, vector<2x8x16xf32>
    %cst_7 = arith.constant dense<0xFF800000> : vector<2x16xf32>
    %11 = vector.multi_reduction <maximumf>, %10, %cst_7 [1] : vector<2x8x16xf32> to vector<2x16xf32>
    %12 = vector.shape_cast %11 : vector<2x16xf32> to vector<2x1x16xf32>
    %13 = arith.cmpf oge, %12, %8 : vector<2x1x16xf32>
    %14 = arith.extui %13 : vector<2x1x16xi1> to vector<2x1x16xi32>
    %15 = arith.sitofp %14 : vector<2x1x16xi32> to vector<2x1x16xf32>
    %cst_8 = arith.constant dense<0.000000e+00> : vector<2x1xf32>
    %16 = vector.multi_reduction <add>, %15, %cst_8 [2] : vector<2x1x16xf32> to vector<2x1xf32>
    %17 = vector.shape_cast %16 : vector<2x1xf32> to vector<2x1x1xf32>
    %cst_9 = arith.constant 3.000000e+00 : f32
    %18 = vector.broadcast %cst_9 : f32 to vector<2x1x1xf32>
    %19 = arith.subf %17, %18 : vector<2x1x1xf32>
    %20 = math.absf %19 : vector<2x1x1xf32>
    %21 = vector.extract_strided_slice %20 {offsets = [0, 0, 0], sizes = [1, 1, 1], strides = [1, 1, 1]} : vector<2x1x1xf32> to vector<1x1x1xf32>
    %22 = vector.shape_cast %21 : vector<1x1x1xf32> to vector<1x1xf32>
    %23 = vector.extract_strided_slice %20 {offsets = [1, 0, 0], sizes = [1, 1, 1], strides = [1, 1, 1]} : vector<2x1x1xf32> to vector<1x1x1xf32>
    %24 = vector.shape_cast %23 : vector<1x1x1xf32> to vector<1x1xf32>
    %25 = arith.addf %22, %24 : vector<1x1xf32>
    %cst_10 = arith.constant 5.000000e-01 : f32
    %26 = vector.broadcast %cst_10 : f32 to vector<1x1xf32>
    %27 = arith.mulf %25, %26 : vector<1x1xf32>
    %28 = vector.broadcast %1 : vector<1x8x1xf32> to vector<2x8x16xf32>
    %29 = arith.addf %0, %28 : vector<2x8x16xf32>
    %cst_11 = arith.constant 0.000000e+00 : f32
    %30 = vector.broadcast %cst_11 : f32 to vector<2x8x16xf32>
    %31 = arith.maximumf %29, %30 : vector<2x8x16xf32>
    %32 = math.absf %29 : vector<2x8x16xf32>
    %cst_12 = arith.constant 0.000000e+00 : f32
    %33 = vector.broadcast %cst_12 : f32 to vector<2x8x16xf32>
    %34 = arith.subf %33, %32 : vector<2x8x16xf32>
    %35 = math.exp %34 : vector<2x8x16xf32>
    %cst_13 = arith.constant 1.000000e+00 : f32
    %36 = vector.broadcast %cst_13 : f32 to vector<2x8x16xf32>
    %37 = arith.addf %36, %35 : vector<2x8x16xf32>
    %38 = math.log %37 : vector<2x8x16xf32>
    %39 = arith.addf %31, %38 : vector<2x8x16xf32>
    %cst_14 = arith.constant 1.000000e+00 : f32
    %40 = vector.broadcast %cst_14 : f32 to vector<2x8x16xf32>
    %41 = arith.addf %39, %40 : vector<2x8x16xf32>
    %cst_15 = arith.constant dense<0.000000e+00> : vector<2x16xf32>
    %42 = vector.multi_reduction <add>, %41, %cst_15 [1] : vector<2x8x16xf32> to vector<2x16xf32>
    %43 = vector.shape_cast %42 : vector<2x16xf32> to vector<2x1x16xf32>
    %cst_16 = arith.constant 0.000000e+00 : f32
    %44 = vector.broadcast %cst_16 : f32 to vector<2x8x16xf32>
    %45 = arith.select %4, %41, %44 : vector<2x8x16xi1>, vector<2x8x16xf32>
    %cst_17 = arith.constant dense<0.000000e+00> : vector<2x16xf32>
    %46 = vector.multi_reduction <add>, %45, %cst_17 [1] : vector<2x8x16xf32> to vector<2x16xf32>
    %47 = vector.shape_cast %46 : vector<2x16xf32> to vector<2x1x16xf32>
    %48 = tpu.iota {dimensions = array<i32: 1>} : vector<2x2x16xi32>
    %c0_i32 = arith.constant 0 : i32
    %49 = vector.broadcast %c0_i32 : i32 to vector<2x2x16xi32>
    %50 = arith.cmpi eq, %48, %49 : vector<2x2x16xi32>
    %51 = vector.shape_cast %43 : vector<2x1x16xf32> to vector<2x1x16xf32>
    %52 = vector.broadcast %51 : vector<2x1x16xf32> to vector<2x2x16xf32>
    %53 = vector.shape_cast %47 : vector<2x1x16xf32> to vector<2x1x16xf32>
    %54 = vector.broadcast %53 : vector<2x1x16xf32> to vector<2x2x16xf32>
    %55 = arith.select %50, %52, %54 : vector<2x2x16xi1>, vector<2x2x16xf32>
    %cst_18 = arith.constant 0.000000e+00 : f32
    %56 = vector.broadcast %cst_18 : f32 to vector<2x2x16xf32>
    %cst_19 = arith.constant 7.000000e+00 : f32
    %57 = vector.broadcast %cst_19 : f32 to vector<2x2x16xf32>
    %58 = arith.cmpf olt, %55, %57 : vector<2x2x16xf32>
    %59 = tpu.reciprocal %55 {approx = true} : vector<2x2x16xf32> -> vector<2x2x16xf32>
    %cst_20 = arith.constant 0.000000e+00 : f32
    %60 = vector.broadcast %cst_20 : f32 to vector<2x2x16xf32>
    %61 = arith.select %58, %59, %60 : vector<2x2x16xi1>, vector<2x2x16xf32>
    %62 = arith.subf %56, %61 : vector<2x2x16xf32>
    %cst_21 = arith.constant 1.000000e+00 : f32
    %63 = vector.broadcast %cst_21 : f32 to vector<2x2x16xf32>
    %64 = arith.addf %55, %63 : vector<2x2x16xf32>
    %65 = arith.select %58, %64, %55 : vector<2x2x16xi1>, vector<2x2x16xf32>
    %cst_22 = arith.constant 7.000000e+00 : f32
    %66 = vector.broadcast %cst_22 : f32 to vector<2x2x16xf32>
    %67 = arith.cmpf olt, %65, %66 : vector<2x2x16xf32>
    %68 = tpu.reciprocal %65 {approx = true} : vector<2x2x16xf32> -> vector<2x2x16xf32>
    %cst_23 = arith.constant 0.000000e+00 : f32
    %69 = vector.broadcast %cst_23 : f32 to vector<2x2x16xf32>
    %70 = arith.select %67, %68, %69 : vector<2x2x16xi1>, vector<2x2x16xf32>
    %71 = arith.subf %62, %70 : vector<2x2x16xf32>
    %cst_24 = arith.constant 1.000000e+00 : f32
    %72 = vector.broadcast %cst_24 : f32 to vector<2x2x16xf32>
    %73 = arith.addf %65, %72 : vector<2x2x16xf32>
    %74 = arith.select %67, %73, %65 : vector<2x2x16xi1>, vector<2x2x16xf32>
    %cst_25 = arith.constant 7.000000e+00 : f32
    %75 = vector.broadcast %cst_25 : f32 to vector<2x2x16xf32>
    %76 = arith.cmpf olt, %74, %75 : vector<2x2x16xf32>
    %77 = tpu.reciprocal %74 {approx = true} : vector<2x2x16xf32> -> vector<2x2x16xf32>
    %cst_26 = arith.constant 0.000000e+00 : f32
    %78 = vector.broadcast %cst_26 : f32 to vector<2x2x16xf32>
    %79 = arith.select %76, %77, %78 : vector<2x2x16xi1>, vector<2x2x16xf32>
    %80 = arith.subf %71, %79 : vector<2x2x16xf32>
    %cst_27 = arith.constant 1.000000e+00 : f32
    %81 = vector.broadcast %cst_27 : f32 to vector<2x2x16xf32>
    %82 = arith.addf %74, %81 : vector<2x2x16xf32>
    %83 = arith.select %76, %82, %74 : vector<2x2x16xi1>, vector<2x2x16xf32>
    %cst_28 = arith.constant 7.000000e+00 : f32
    %84 = vector.broadcast %cst_28 : f32 to vector<2x2x16xf32>
    %85 = arith.cmpf olt, %83, %84 : vector<2x2x16xf32>
    %86 = tpu.reciprocal %83 {approx = true} : vector<2x2x16xf32> -> vector<2x2x16xf32>
    %cst_29 = arith.constant 0.000000e+00 : f32
    %87 = vector.broadcast %cst_29 : f32 to vector<2x2x16xf32>
    %88 = arith.select %85, %86, %87 : vector<2x2x16xi1>, vector<2x2x16xf32>
    %89 = arith.subf %80, %88 : vector<2x2x16xf32>
    %cst_30 = arith.constant 1.000000e+00 : f32
    %90 = vector.broadcast %cst_30 : f32 to vector<2x2x16xf32>
    %91 = arith.addf %83, %90 : vector<2x2x16xf32>
    %92 = arith.select %85, %91, %83 : vector<2x2x16xi1>, vector<2x2x16xf32>
    %cst_31 = arith.constant 7.000000e+00 : f32
    %93 = vector.broadcast %cst_31 : f32 to vector<2x2x16xf32>
    %94 = arith.cmpf olt, %92, %93 : vector<2x2x16xf32>
    %95 = tpu.reciprocal %92 {approx = true} : vector<2x2x16xf32> -> vector<2x2x16xf32>
    %cst_32 = arith.constant 0.000000e+00 : f32
    %96 = vector.broadcast %cst_32 : f32 to vector<2x2x16xf32>
    %97 = arith.select %94, %95, %96 : vector<2x2x16xi1>, vector<2x2x16xf32>
    %98 = arith.subf %89, %97 : vector<2x2x16xf32>
    %cst_33 = arith.constant 1.000000e+00 : f32
    %99 = vector.broadcast %cst_33 : f32 to vector<2x2x16xf32>
    %100 = arith.addf %92, %99 : vector<2x2x16xf32>
    %101 = arith.select %94, %100, %92 : vector<2x2x16xi1>, vector<2x2x16xf32>
    %cst_34 = arith.constant 7.000000e+00 : f32
    %102 = vector.broadcast %cst_34 : f32 to vector<2x2x16xf32>
    %103 = arith.cmpf olt, %101, %102 : vector<2x2x16xf32>
    %104 = tpu.reciprocal %101 {approx = true} : vector<2x2x16xf32> -> vector<2x2x16xf32>
    %cst_35 = arith.constant 0.000000e+00 : f32
    %105 = vector.broadcast %cst_35 : f32 to vector<2x2x16xf32>
    %106 = arith.select %103, %104, %105 : vector<2x2x16xi1>, vector<2x2x16xf32>
    %107 = arith.subf %98, %106 : vector<2x2x16xf32>
    %cst_36 = arith.constant 1.000000e+00 : f32
    %108 = vector.broadcast %cst_36 : f32 to vector<2x2x16xf32>
    %109 = arith.addf %101, %108 : vector<2x2x16xf32>
    %110 = arith.select %103, %109, %101 : vector<2x2x16xi1>, vector<2x2x16xf32>
    %111 = tpu.reciprocal %110 {approx = true} : vector<2x2x16xf32> -> vector<2x2x16xf32>
    %112 = arith.mulf %111, %111 : vector<2x2x16xf32>
    %cst_37 = arith.constant 0.0039682542 : f32
    %113 = vector.broadcast %cst_37 : f32 to vector<2x2x16xf32>
    %114 = arith.mulf %112, %113 : vector<2x2x16xf32>
    %cst_38 = arith.constant 0.00833333377 : f32
    %115 = vector.broadcast %cst_38 : f32 to vector<2x2x16xf32>
    %116 = arith.subf %115, %114 : vector<2x2x16xf32>
    %117 = arith.mulf %112, %116 : vector<2x2x16xf32>
    %cst_39 = arith.constant 0.0833333358 : f32
    %118 = vector.broadcast %cst_39 : f32 to vector<2x2x16xf32>
    %119 = arith.subf %118, %117 : vector<2x2x16xf32>
    %120 = arith.mulf %112, %119 : vector<2x2x16xf32>
    %121 = math.log %110 : vector<2x2x16xf32>
    %cst_40 = arith.constant 5.000000e-01 : f32
    %122 = vector.broadcast %cst_40 : f32 to vector<2x2x16xf32>
    %123 = arith.mulf %122, %111 : vector<2x2x16xf32>
    %124 = arith.subf %121, %123 : vector<2x2x16xf32>
    %125 = arith.subf %124, %120 : vector<2x2x16xf32>
    %126 = arith.addf %125, %107 : vector<2x2x16xf32>
    %cst_41 = arith.constant 1.000000e+00 : f32
    %cst_42 = arith.constant -1.000000e+00 : f32
    %127 = vector.broadcast %cst_41 : f32 to vector<2x2x16xf32>
    %128 = vector.broadcast %cst_42 : f32 to vector<2x2x16xf32>
    %129 = arith.select %50, %127, %128 : vector<2x2x16xi1>, vector<2x2x16xf32>
    %130 = arith.mulf %126, %129 : vector<2x2x16xf32>
    %cst_43 = arith.constant dense<0.000000e+00> : vector<2x2xf32>
    %131 = vector.multi_reduction <add>, %130, %cst_43 [2] : vector<2x2x16xf32> to vector<2x2xf32>
    %132 = vector.shape_cast %131 : vector<2x2xf32> to vector<2x2x1xf32>
    %cst_44 = arith.constant dense<0.000000e+00> : vector<2x1xf32>
    %133 = vector.multi_reduction <add>, %132, %cst_44 [1] : vector<2x2x1xf32> to vector<2x1xf32>
    %134 = vector.shape_cast %133 : vector<2x1xf32> to vector<2x1x1xf32>
    %135 = vector.extract_strided_slice %134 {offsets = [0, 0, 0], sizes = [1, 1, 1], strides = [1, 1, 1]} : vector<2x1x1xf32> to vector<1x1x1xf32>
    %136 = vector.shape_cast %135 : vector<1x1x1xf32> to vector<1x1xf32>
    %137 = vector.extract_strided_slice %134 {offsets = [1, 0, 0], sizes = [1, 1, 1], strides = [1, 1, 1]} : vector<2x1x1xf32> to vector<1x1x1xf32>
    %138 = vector.shape_cast %137 : vector<1x1x1xf32> to vector<1x1xf32>
    %139 = arith.addf %136, %138 : vector<1x1xf32>
    %c0_45 = arith.constant 0 : index
    %c0_46 = arith.constant 0 : index
    %c0_47 = arith.constant 0 : index
    %140 = vector.load %arg0[%c0_45, %c0_46, %c0_47] : memref<2x8x16xf32, #tpu.memory_space<vmem>>, vector<2x8x3xf32>
    %141 = vector.broadcast %1 : vector<1x8x1xf32> to vector<2x8x3xf32>
    %142 = arith.addf %140, %141 : vector<2x8x3xf32>
    %cst_48 = arith.constant 0.000000e+00 : f32
    %143 = vector.broadcast %cst_48 : f32 to vector<2x8x3xf32>
    %144 = arith.maximumf %142, %143 : vector<2x8x3xf32>
    %145 = math.absf %142 : vector<2x8x3xf32>
    %cst_49 = arith.constant 0.000000e+00 : f32
    %146 = vector.broadcast %cst_49 : f32 to vector<2x8x3xf32>
    %147 = arith.subf %146, %145 : vector<2x8x3xf32>
    %148 = math.exp %147 : vector<2x8x3xf32>
    %cst_50 = arith.constant 1.000000e+00 : f32
    %149 = vector.broadcast %cst_50 : f32 to vector<2x8x3xf32>
    %150 = arith.addf %149, %148 : vector<2x8x3xf32>
    %151 = math.log %150 : vector<2x8x3xf32>
    %152 = arith.addf %144, %151 : vector<2x8x3xf32>
    %cst_51 = arith.constant 1.000000e+00 : f32
    %153 = vector.broadcast %cst_51 : f32 to vector<2x8x3xf32>
    %154 = arith.addf %152, %153 : vector<2x8x3xf32>
    %155 = tpu.iota {dimensions = array<i32: 1>} : vector<2x8x3xi32>
    %c0_52 = arith.constant 0 : index
    %c0_53 = arith.constant 0 : index
    %c0_54 = arith.constant 0 : index
    %156 = vector.load %arg2[%c0_52, %c0_53, %c0_54] : memref<2x1x3xi32, #tpu.memory_space<vmem>>, vector<2x1x3xi32>
    %157 = vector.broadcast %156 : vector<2x1x3xi32> to vector<2x8x3xi32>
    %158 = arith.cmpi eq, %155, %157 : vector<2x8x3xi32>
    %cst_55 = arith.constant 0.000000e+00 : f32
    %159 = vector.broadcast %cst_55 : f32 to vector<2x8x3xf32>
    %160 = arith.select %158, %154, %159 : vector<2x8x3xi1>, vector<2x8x3xf32>
    %cst_56 = arith.constant dense<0.000000e+00> : vector<2x3xf32>
    %161 = vector.multi_reduction <add>, %160, %cst_56 [1] : vector<2x8x3xf32> to vector<2x3xf32>
    %162 = vector.shape_cast %161 : vector<2x3xf32> to vector<2x1x3xf32>
    %c7_i32_57 = arith.constant 7 : i32
    %163 = vector.broadcast %c7_i32_57 : i32 to vector<2x8x3xi32>
    %164 = arith.cmpi eq, %155, %163 : vector<2x8x3xi32>
    %cst_58 = arith.constant 0.000000e+00 : f32
    %165 = vector.broadcast %cst_58 : f32 to vector<2x8x3xf32>
    %166 = arith.select %164, %154, %165 : vector<2x8x3xi1>, vector<2x8x3xf32>
    %cst_59 = arith.constant dense<0.000000e+00> : vector<2x3xf32>
    %167 = vector.multi_reduction <add>, %166, %cst_59 [1] : vector<2x8x3xf32> to vector<2x3xf32>
    %168 = vector.shape_cast %167 : vector<2x3xf32> to vector<2x1x3xf32>
    %169 = tpu.iota {dimensions = array<i32: 1>} : vector<2x2x3xi32>
    %c0_i32_60 = arith.constant 0 : i32
    %170 = vector.broadcast %c0_i32_60 : i32 to vector<2x2x3xi32>
    %171 = arith.cmpi eq, %169, %170 : vector<2x2x3xi32>
    %172 = vector.shape_cast %168 : vector<2x1x3xf32> to vector<2x1x3xf32>
    %173 = vector.broadcast %172 : vector<2x1x3xf32> to vector<2x2x3xf32>
    %174 = vector.shape_cast %162 : vector<2x1x3xf32> to vector<2x1x3xf32>
    %175 = vector.broadcast %174 : vector<2x1x3xf32> to vector<2x2x3xf32>
    %176 = arith.select %171, %173, %175 : vector<2x2x3xi1>, vector<2x2x3xf32>
    %cst_61 = arith.constant 0.000000e+00 : f32
    %177 = vector.broadcast %cst_61 : f32 to vector<2x2x3xf32>
    %cst_62 = arith.constant 7.000000e+00 : f32
    %178 = vector.broadcast %cst_62 : f32 to vector<2x2x3xf32>
    %179 = arith.cmpf olt, %176, %178 : vector<2x2x3xf32>
    %180 = tpu.reciprocal %176 {approx = true} : vector<2x2x3xf32> -> vector<2x2x3xf32>
    %cst_63 = arith.constant 0.000000e+00 : f32
    %181 = vector.broadcast %cst_63 : f32 to vector<2x2x3xf32>
    %182 = arith.select %179, %180, %181 : vector<2x2x3xi1>, vector<2x2x3xf32>
    %183 = arith.subf %177, %182 : vector<2x2x3xf32>
    %cst_64 = arith.constant 1.000000e+00 : f32
    %184 = vector.broadcast %cst_64 : f32 to vector<2x2x3xf32>
    %185 = arith.addf %176, %184 : vector<2x2x3xf32>
    %186 = arith.select %179, %185, %176 : vector<2x2x3xi1>, vector<2x2x3xf32>
    %cst_65 = arith.constant 7.000000e+00 : f32
    %187 = vector.broadcast %cst_65 : f32 to vector<2x2x3xf32>
    %188 = arith.cmpf olt, %186, %187 : vector<2x2x3xf32>
    %189 = tpu.reciprocal %186 {approx = true} : vector<2x2x3xf32> -> vector<2x2x3xf32>
    %cst_66 = arith.constant 0.000000e+00 : f32
    %190 = vector.broadcast %cst_66 : f32 to vector<2x2x3xf32>
    %191 = arith.select %188, %189, %190 : vector<2x2x3xi1>, vector<2x2x3xf32>
    %192 = arith.subf %183, %191 : vector<2x2x3xf32>
    %cst_67 = arith.constant 1.000000e+00 : f32
    %193 = vector.broadcast %cst_67 : f32 to vector<2x2x3xf32>
    %194 = arith.addf %186, %193 : vector<2x2x3xf32>
    %195 = arith.select %188, %194, %186 : vector<2x2x3xi1>, vector<2x2x3xf32>
    %cst_68 = arith.constant 7.000000e+00 : f32
    %196 = vector.broadcast %cst_68 : f32 to vector<2x2x3xf32>
    %197 = arith.cmpf olt, %195, %196 : vector<2x2x3xf32>
    %198 = tpu.reciprocal %195 {approx = true} : vector<2x2x3xf32> -> vector<2x2x3xf32>
    %cst_69 = arith.constant 0.000000e+00 : f32
    %199 = vector.broadcast %cst_69 : f32 to vector<2x2x3xf32>
    %200 = arith.select %197, %198, %199 : vector<2x2x3xi1>, vector<2x2x3xf32>
    %201 = arith.subf %192, %200 : vector<2x2x3xf32>
    %cst_70 = arith.constant 1.000000e+00 : f32
    %202 = vector.broadcast %cst_70 : f32 to vector<2x2x3xf32>
    %203 = arith.addf %195, %202 : vector<2x2x3xf32>
    %204 = arith.select %197, %203, %195 : vector<2x2x3xi1>, vector<2x2x3xf32>
    %cst_71 = arith.constant 7.000000e+00 : f32
    %205 = vector.broadcast %cst_71 : f32 to vector<2x2x3xf32>
    %206 = arith.cmpf olt, %204, %205 : vector<2x2x3xf32>
    %207 = tpu.reciprocal %204 {approx = true} : vector<2x2x3xf32> -> vector<2x2x3xf32>
    %cst_72 = arith.constant 0.000000e+00 : f32
    %208 = vector.broadcast %cst_72 : f32 to vector<2x2x3xf32>
    %209 = arith.select %206, %207, %208 : vector<2x2x3xi1>, vector<2x2x3xf32>
    %210 = arith.subf %201, %209 : vector<2x2x3xf32>
    %cst_73 = arith.constant 1.000000e+00 : f32
    %211 = vector.broadcast %cst_73 : f32 to vector<2x2x3xf32>
    %212 = arith.addf %204, %211 : vector<2x2x3xf32>
    %213 = arith.select %206, %212, %204 : vector<2x2x3xi1>, vector<2x2x3xf32>
    %cst_74 = arith.constant 7.000000e+00 : f32
    %214 = vector.broadcast %cst_74 : f32 to vector<2x2x3xf32>
    %215 = arith.cmpf olt, %213, %214 : vector<2x2x3xf32>
    %216 = tpu.reciprocal %213 {approx = true} : vector<2x2x3xf32> -> vector<2x2x3xf32>
    %cst_75 = arith.constant 0.000000e+00 : f32
    %217 = vector.broadcast %cst_75 : f32 to vector<2x2x3xf32>
    %218 = arith.select %215, %216, %217 : vector<2x2x3xi1>, vector<2x2x3xf32>
    %219 = arith.subf %210, %218 : vector<2x2x3xf32>
    %cst_76 = arith.constant 1.000000e+00 : f32
    %220 = vector.broadcast %cst_76 : f32 to vector<2x2x3xf32>
    %221 = arith.addf %213, %220 : vector<2x2x3xf32>
    %222 = arith.select %215, %221, %213 : vector<2x2x3xi1>, vector<2x2x3xf32>
    %cst_77 = arith.constant 7.000000e+00 : f32
    %223 = vector.broadcast %cst_77 : f32 to vector<2x2x3xf32>
    %224 = arith.cmpf olt, %222, %223 : vector<2x2x3xf32>
    %225 = tpu.reciprocal %222 {approx = true} : vector<2x2x3xf32> -> vector<2x2x3xf32>
    %cst_78 = arith.constant 0.000000e+00 : f32
    %226 = vector.broadcast %cst_78 : f32 to vector<2x2x3xf32>
    %227 = arith.select %224, %225, %226 : vector<2x2x3xi1>, vector<2x2x3xf32>
    %228 = arith.subf %219, %227 : vector<2x2x3xf32>
    %cst_79 = arith.constant 1.000000e+00 : f32
    %229 = vector.broadcast %cst_79 : f32 to vector<2x2x3xf32>
    %230 = arith.addf %222, %229 : vector<2x2x3xf32>
    %231 = arith.select %224, %230, %222 : vector<2x2x3xi1>, vector<2x2x3xf32>
    %232 = tpu.reciprocal %231 {approx = true} : vector<2x2x3xf32> -> vector<2x2x3xf32>
    %233 = arith.mulf %232, %232 : vector<2x2x3xf32>
    %cst_80 = arith.constant 0.0039682542 : f32
    %234 = vector.broadcast %cst_80 : f32 to vector<2x2x3xf32>
    %235 = arith.mulf %233, %234 : vector<2x2x3xf32>
    %cst_81 = arith.constant 0.00833333377 : f32
    %236 = vector.broadcast %cst_81 : f32 to vector<2x2x3xf32>
    %237 = arith.subf %236, %235 : vector<2x2x3xf32>
    %238 = arith.mulf %233, %237 : vector<2x2x3xf32>
    %cst_82 = arith.constant 0.0833333358 : f32
    %239 = vector.broadcast %cst_82 : f32 to vector<2x2x3xf32>
    %240 = arith.subf %239, %238 : vector<2x2x3xf32>
    %241 = arith.mulf %233, %240 : vector<2x2x3xf32>
    %242 = math.log %231 : vector<2x2x3xf32>
    %cst_83 = arith.constant 5.000000e-01 : f32
    %243 = vector.broadcast %cst_83 : f32 to vector<2x2x3xf32>
    %244 = arith.mulf %243, %232 : vector<2x2x3xf32>
    %245 = arith.subf %242, %244 : vector<2x2x3xf32>
    %246 = arith.subf %245, %241 : vector<2x2x3xf32>
    %247 = arith.addf %246, %228 : vector<2x2x3xf32>
    %cst_84 = arith.constant 1.000000e+00 : f32
    %cst_85 = arith.constant -1.000000e+00 : f32
    %248 = vector.broadcast %cst_84 : f32 to vector<2x2x3xf32>
    %249 = vector.broadcast %cst_85 : f32 to vector<2x2x3xf32>
    %250 = arith.select %171, %248, %249 : vector<2x2x3xi1>, vector<2x2x3xf32>
    %251 = arith.mulf %247, %250 : vector<2x2x3xf32>
    %cst_86 = arith.constant dense<0.000000e+00> : vector<2x2xf32>
    %252 = vector.multi_reduction <add>, %251, %cst_86 [2] : vector<2x2x3xf32> to vector<2x2xf32>
    %253 = vector.shape_cast %252 : vector<2x2xf32> to vector<2x2x1xf32>
    %cst_87 = arith.constant dense<0.000000e+00> : vector<2x1xf32>
    %254 = vector.multi_reduction <add>, %253, %cst_87 [1] : vector<2x2x1xf32> to vector<2x1xf32>
    %255 = vector.shape_cast %254 : vector<2x1xf32> to vector<2x1x1xf32>
    %256 = vector.extract_strided_slice %255 {offsets = [0, 0, 0], sizes = [1, 1, 1], strides = [1, 1, 1]} : vector<2x1x1xf32> to vector<1x1x1xf32>
    %257 = vector.shape_cast %256 : vector<1x1x1xf32> to vector<1x1xf32>
    %258 = vector.extract_strided_slice %255 {offsets = [1, 0, 0], sizes = [1, 1, 1], strides = [1, 1, 1]} : vector<2x1x1xf32> to vector<1x1x1xf32>
    %259 = vector.shape_cast %258 : vector<1x1x1xf32> to vector<1x1xf32>
    %260 = arith.addf %257, %259 : vector<1x1xf32>
    %261 = arith.addf %139, %260 : vector<1x1xf32>
    %cst_88 = arith.constant 3.125000e-02 : f32
    %262 = vector.broadcast %cst_88 : f32 to vector<1x1xf32>
    %263 = arith.mulf %261, %262 : vector<1x1xf32>
    %cst_89 = arith.constant dense<0xFF800000> : vector<2x3xf32>
    %264 = vector.multi_reduction <maximumf>, %154, %cst_89 [1] : vector<2x8x3xf32> to vector<2x3xf32>
    %265 = vector.shape_cast %264 : vector<2x3xf32> to vector<2x1x3xf32>
    %266 = arith.cmpf oge, %162, %265 : vector<2x1x3xf32>
    %267 = arith.extui %266 : vector<2x1x3xi1> to vector<2x1x3xi32>
    %268 = arith.sitofp %267 : vector<2x1x3xi32> to vector<2x1x3xf32>
    %cst_90 = arith.constant dense<0.000000e+00> : vector<2x1xf32>
    %269 = vector.multi_reduction <add>, %268, %cst_90 [2] : vector<2x1x3xf32> to vector<2x1xf32>
    %270 = vector.shape_cast %269 : vector<2x1xf32> to vector<2x1x1xf32>
    %cst_91 = arith.constant dense<0.000000e+00> : vector<2x1xf32>
    %271 = vector.multi_reduction <add>, %270, %cst_91 [1] : vector<2x1x1xf32> to vector<2x1xf32>
    %272 = vector.shape_cast %271 : vector<2x1xf32> to vector<2x1x1xf32>
    %273 = vector.extract_strided_slice %272 {offsets = [0, 0, 0], sizes = [1, 1, 1], strides = [1, 1, 1]} : vector<2x1x1xf32> to vector<1x1x1xf32>
    %274 = vector.shape_cast %273 : vector<1x1x1xf32> to vector<1x1xf32>
    %275 = vector.extract_strided_slice %272 {offsets = [1, 0, 0], sizes = [1, 1, 1], strides = [1, 1, 1]} : vector<2x1x1xf32> to vector<1x1x1xf32>
    %276 = vector.shape_cast %275 : vector<1x1x1xf32> to vector<1x1xf32>
    %277 = arith.addf %274, %276 : vector<1x1xf32>
    %cst_92 = arith.constant 16.666666 : f32
    %278 = vector.broadcast %cst_92 : f32 to vector<1x1xf32>
    %279 = arith.mulf %277, %278 : vector<1x1xf32>
    %cst_93 = arith.constant 1.000000e+02 : f32
    %280 = vector.broadcast %cst_93 : f32 to vector<1x1xf32>
    %281 = arith.subf %280, %279 : vector<1x1xf32>
    %c0_94 = arith.constant 0 : index
    %c0_95 = arith.constant 0 : index
    %c0_96 = arith.constant 0 : index
    %282 = vector.load %arg3[%c0_94, %c0_95, %c0_96] : memref<2x16x4xf32, #tpu.memory_space<vmem>>, vector<2x3x4xf32>
    %c0_97 = arith.constant 0 : index
    %c0_98 = arith.constant 0 : index
    %c0_99 = arith.constant 0 : index
    %283 = vector.load %arg4[%c0_97, %c0_98, %c0_99] : memref<2x3x4xf32, #tpu.memory_space<vmem>>, vector<2x3x4xf32>
    %284 = arith.subf %282, %283 : vector<2x3x4xf32>
    %285 = math.absf %284 : vector<2x3x4xf32>
    %cst_100 = arith.constant dense<0.000000e+00> : vector<2x3xf32>
    %286 = vector.multi_reduction <add>, %285, %cst_100 [2] : vector<2x3x4xf32> to vector<2x3xf32>
    %287 = vector.shape_cast %286 : vector<2x3xf32> to vector<2x3x1xf32>
    %cst_101 = arith.constant dense<0.000000e+00> : vector<2x1xf32>
    %288 = vector.multi_reduction <add>, %287, %cst_101 [1] : vector<2x3x1xf32> to vector<2x1xf32>
    %289 = vector.shape_cast %288 : vector<2x1xf32> to vector<2x1x1xf32>
    %290 = vector.extract_strided_slice %289 {offsets = [0, 0, 0], sizes = [1, 1, 1], strides = [1, 1, 1]} : vector<2x1x1xf32> to vector<1x1x1xf32>
    %291 = vector.shape_cast %290 : vector<1x1x1xf32> to vector<1x1xf32>
    %292 = vector.extract_strided_slice %289 {offsets = [1, 0, 0], sizes = [1, 1, 1], strides = [1, 1, 1]} : vector<2x1x1xf32> to vector<1x1x1xf32>
    %293 = vector.shape_cast %292 : vector<1x1x1xf32> to vector<1x1xf32>
    %294 = arith.addf %291, %293 : vector<1x1xf32>
    %cst_102 = arith.constant 0.166666672 : f32
    %295 = vector.broadcast %cst_102 : f32 to vector<1x1xf32>
    %296 = arith.mulf %294, %295 : vector<1x1xf32>
    %297 = tpu.iota {dimensions = array<i32: 2>} : vector<2x3x4xi32>
    %c0_i32_103 = arith.constant 0 : i32
    %298 = vector.broadcast %c0_i32_103 : i32 to vector<2x3x4xi32>
    %299 = arith.cmpi eq, %297, %298 : vector<2x3x4xi32>
    %cst_104 = arith.constant 0.000000e+00 : f32
    %300 = vector.broadcast %cst_104 : f32 to vector<2x3x4xf32>
    %301 = arith.select %299, %282, %300 : vector<2x3x4xi1>, vector<2x3x4xf32>
    %cst_105 = arith.constant dense<0.000000e+00> : vector<2x3xf32>
    %302 = vector.multi_reduction <add>, %301, %cst_105 [2] : vector<2x3x4xf32> to vector<2x3xf32>
    %303 = vector.shape_cast %302 : vector<2x3xf32> to vector<2x3x1xf32>
    %c1_i32 = arith.constant 1 : i32
    %304 = vector.broadcast %c1_i32 : i32 to vector<2x3x4xi32>
    %305 = arith.cmpi eq, %297, %304 : vector<2x3x4xi32>
    %cst_106 = arith.constant 0.000000e+00 : f32
    %306 = vector.broadcast %cst_106 : f32 to vector<2x3x4xf32>
    %307 = arith.select %305, %282, %306 : vector<2x3x4xi1>, vector<2x3x4xf32>
    %cst_107 = arith.constant dense<0.000000e+00> : vector<2x3xf32>
    %308 = vector.multi_reduction <add>, %307, %cst_107 [2] : vector<2x3x4xf32> to vector<2x3xf32>
    %309 = vector.shape_cast %308 : vector<2x3xf32> to vector<2x3x1xf32>
    %c2_i32 = arith.constant 2 : i32
    %310 = vector.broadcast %c2_i32 : i32 to vector<2x3x4xi32>
    %311 = arith.cmpi eq, %297, %310 : vector<2x3x4xi32>
    %cst_108 = arith.constant 0.000000e+00 : f32
    %312 = vector.broadcast %cst_108 : f32 to vector<2x3x4xf32>
    %313 = arith.select %311, %282, %312 : vector<2x3x4xi1>, vector<2x3x4xf32>
    %cst_109 = arith.constant dense<0.000000e+00> : vector<2x3xf32>
    %314 = vector.multi_reduction <add>, %313, %cst_109 [2] : vector<2x3x4xf32> to vector<2x3xf32>
    %315 = vector.shape_cast %314 : vector<2x3xf32> to vector<2x3x1xf32>
    %c3_i32 = arith.constant 3 : i32
    %316 = vector.broadcast %c3_i32 : i32 to vector<2x3x4xi32>
    %317 = arith.cmpi eq, %297, %316 : vector<2x3x4xi32>
    %cst_110 = arith.constant 0.000000e+00 : f32
    %318 = vector.broadcast %cst_110 : f32 to vector<2x3x4xf32>
    %319 = arith.select %317, %282, %318 : vector<2x3x4xi1>, vector<2x3x4xf32>
    %cst_111 = arith.constant dense<0.000000e+00> : vector<2x3xf32>
    %320 = vector.multi_reduction <add>, %319, %cst_111 [2] : vector<2x3x4xf32> to vector<2x3xf32>
    %321 = vector.shape_cast %320 : vector<2x3xf32> to vector<2x3x1xf32>
    %c0_i32_112 = arith.constant 0 : i32
    %322 = vector.broadcast %c0_i32_112 : i32 to vector<2x3x4xi32>
    %323 = arith.cmpi eq, %297, %322 : vector<2x3x4xi32>
    %cst_113 = arith.constant 0.000000e+00 : f32
    %324 = vector.broadcast %cst_113 : f32 to vector<2x3x4xf32>
    %325 = arith.select %323, %283, %324 : vector<2x3x4xi1>, vector<2x3x4xf32>
    %cst_114 = arith.constant dense<0.000000e+00> : vector<2x3xf32>
    %326 = vector.multi_reduction <add>, %325, %cst_114 [2] : vector<2x3x4xf32> to vector<2x3xf32>
    %327 = vector.shape_cast %326 : vector<2x3xf32> to vector<2x3x1xf32>
    %c1_i32_115 = arith.constant 1 : i32
    %328 = vector.broadcast %c1_i32_115 : i32 to vector<2x3x4xi32>
    %329 = arith.cmpi eq, %297, %328 : vector<2x3x4xi32>
    %cst_116 = arith.constant 0.000000e+00 : f32
    %330 = vector.broadcast %cst_116 : f32 to vector<2x3x4xf32>
    %331 = arith.select %329, %283, %330 : vector<2x3x4xi1>, vector<2x3x4xf32>
    %cst_117 = arith.constant dense<0.000000e+00> : vector<2x3xf32>
    %332 = vector.multi_reduction <add>, %331, %cst_117 [2] : vector<2x3x4xf32> to vector<2x3xf32>
    %333 = vector.shape_cast %332 : vector<2x3xf32> to vector<2x3x1xf32>
    %c2_i32_118 = arith.constant 2 : i32
    %334 = vector.broadcast %c2_i32_118 : i32 to vector<2x3x4xi32>
    %335 = arith.cmpi eq, %297, %334 : vector<2x3x4xi32>
    %cst_119 = arith.constant 0.000000e+00 : f32
    %336 = vector.broadcast %cst_119 : f32 to vector<2x3x4xf32>
    %337 = arith.select %335, %283, %336 : vector<2x3x4xi1>, vector<2x3x4xf32>
    %cst_120 = arith.constant dense<0.000000e+00> : vector<2x3xf32>
    %338 = vector.multi_reduction <add>, %337, %cst_120 [2] : vector<2x3x4xf32> to vector<2x3xf32>
    %339 = vector.shape_cast %338 : vector<2x3xf32> to vector<2x3x1xf32>
    %c3_i32_121 = arith.constant 3 : i32
    %340 = vector.broadcast %c3_i32_121 : i32 to vector<2x3x4xi32>
    %341 = arith.cmpi eq, %297, %340 : vector<2x3x4xi32>
    %cst_122 = arith.constant 0.000000e+00 : f32
    %342 = vector.broadcast %cst_122 : f32 to vector<2x3x4xf32>
    %343 = arith.select %341, %283, %342 : vector<2x3x4xi1>, vector<2x3x4xf32>
    %cst_123 = arith.constant dense<0.000000e+00> : vector<2x3xf32>
    %344 = vector.multi_reduction <add>, %343, %cst_123 [2] : vector<2x3x4xf32> to vector<2x3xf32>
    %345 = vector.shape_cast %344 : vector<2x3xf32> to vector<2x3x1xf32>
    %cst_124 = arith.constant 5.000000e-01 : f32
    %346 = vector.broadcast %cst_124 : f32 to vector<2x3x1xf32>
    %347 = arith.mulf %346, %315 : vector<2x3x1xf32>
    %348 = arith.subf %303, %347 : vector<2x3x1xf32>
    %cst_125 = arith.constant 5.000000e-01 : f32
    %349 = vector.broadcast %cst_125 : f32 to vector<2x3x1xf32>
    %350 = arith.mulf %349, %321 : vector<2x3x1xf32>
    %351 = arith.subf %309, %350 : vector<2x3x1xf32>
    %cst_126 = arith.constant 5.000000e-01 : f32
    %352 = vector.broadcast %cst_126 : f32 to vector<2x3x1xf32>
    %353 = arith.mulf %352, %315 : vector<2x3x1xf32>
    %354 = arith.addf %303, %353 : vector<2x3x1xf32>
    %cst_127 = arith.constant 5.000000e-01 : f32
    %355 = vector.broadcast %cst_127 : f32 to vector<2x3x1xf32>
    %356 = arith.mulf %355, %321 : vector<2x3x1xf32>
    %357 = arith.addf %309, %356 : vector<2x3x1xf32>
    %cst_128 = arith.constant 5.000000e-01 : f32
    %358 = vector.broadcast %cst_128 : f32 to vector<2x3x1xf32>
    %359 = arith.mulf %358, %339 : vector<2x3x1xf32>
    %360 = arith.subf %327, %359 : vector<2x3x1xf32>
    %cst_129 = arith.constant 5.000000e-01 : f32
    %361 = vector.broadcast %cst_129 : f32 to vector<2x3x1xf32>
    %362 = arith.mulf %361, %345 : vector<2x3x1xf32>
    %363 = arith.subf %333, %362 : vector<2x3x1xf32>
    %cst_130 = arith.constant 5.000000e-01 : f32
    %364 = vector.broadcast %cst_130 : f32 to vector<2x3x1xf32>
    %365 = arith.mulf %364, %339 : vector<2x3x1xf32>
    %366 = arith.addf %327, %365 : vector<2x3x1xf32>
    %cst_131 = arith.constant 5.000000e-01 : f32
    %367 = vector.broadcast %cst_131 : f32 to vector<2x3x1xf32>
    %368 = arith.mulf %367, %345 : vector<2x3x1xf32>
    %369 = arith.addf %333, %368 : vector<2x3x1xf32>
    %370 = arith.subf %354, %348 : vector<2x3x1xf32>
    %371 = arith.subf %357, %351 : vector<2x3x1xf32>
    %372 = arith.mulf %370, %371 : vector<2x3x1xf32>
    %373 = arith.subf %366, %360 : vector<2x3x1xf32>
    %374 = arith.subf %369, %363 : vector<2x3x1xf32>
    %375 = arith.mulf %373, %374 : vector<2x3x1xf32>
    %376 = arith.minimumf %354, %366 : vector<2x3x1xf32>
    %377 = arith.maximumf %348, %360 : vector<2x3x1xf32>
    %378 = arith.subf %376, %377 : vector<2x3x1xf32>
    %cst_132 = arith.constant 0.000000e+00 : f32
    %379 = vector.broadcast %cst_132 : f32 to vector<2x3x1xf32>
    %380 = arith.maximumf %378, %379 : vector<2x3x1xf32>
    %381 = arith.minimumf %357, %369 : vector<2x3x1xf32>
    %382 = arith.maximumf %351, %363 : vector<2x3x1xf32>
    %383 = arith.subf %381, %382 : vector<2x3x1xf32>
    %cst_133 = arith.constant 0.000000e+00 : f32
    %384 = vector.broadcast %cst_133 : f32 to vector<2x3x1xf32>
    %385 = arith.maximumf %383, %384 : vector<2x3x1xf32>
    %386 = arith.mulf %380, %385 : vector<2x3x1xf32>
    %387 = arith.addf %372, %375 : vector<2x3x1xf32>
    %388 = arith.subf %387, %386 : vector<2x3x1xf32>
    %cst_134 = arith.constant 1.000000e-07 : f32
    %389 = vector.broadcast %cst_134 : f32 to vector<2x3x1xf32>
    %390 = arith.maximumf %388, %389 : vector<2x3x1xf32>
    %391 = arith.divf %386, %390 : vector<2x3x1xf32>
    %392 = arith.maximumf %354, %366 : vector<2x3x1xf32>
    %393 = arith.minimumf %348, %360 : vector<2x3x1xf32>
    %394 = arith.subf %392, %393 : vector<2x3x1xf32>
    %cst_135 = arith.constant 0.000000e+00 : f32
    %395 = vector.broadcast %cst_135 : f32 to vector<2x3x1xf32>
    %396 = arith.maximumf %394, %395 : vector<2x3x1xf32>
    %397 = arith.maximumf %357, %369 : vector<2x3x1xf32>
    %398 = arith.minimumf %351, %363 : vector<2x3x1xf32>
    %399 = arith.subf %397, %398 : vector<2x3x1xf32>
    %cst_136 = arith.constant 0.000000e+00 : f32
    %400 = vector.broadcast %cst_136 : f32 to vector<2x3x1xf32>
    %401 = arith.maximumf %399, %400 : vector<2x3x1xf32>
    %402 = arith.mulf %396, %401 : vector<2x3x1xf32>
    %403 = arith.subf %402, %388 : vector<2x3x1xf32>
    %cst_137 = arith.constant 1.000000e-07 : f32
    %404 = vector.broadcast %cst_137 : f32 to vector<2x3x1xf32>
    %405 = arith.maximumf %402, %404 : vector<2x3x1xf32>
    %406 = arith.divf %403, %405 : vector<2x3x1xf32>
    %407 = arith.subf %391, %406 : vector<2x3x1xf32>
    %cst_138 = arith.constant 1.000000e+00 : f32
    %408 = vector.broadcast %cst_138 : f32 to vector<2x3x1xf32>
    %409 = arith.subf %408, %407 : vector<2x3x1xf32>
    %cst_139 = arith.constant dense<0.000000e+00> : vector<2x3xf32>
    %410 = vector.multi_reduction <add>, %409, %cst_139 [2] : vector<2x3x1xf32> to vector<2x3xf32>
    %411 = vector.shape_cast %410 : vector<2x3xf32> to vector<2x3x1xf32>
    %cst_140 = arith.constant dense<0.000000e+00> : vector<2x1xf32>
    %412 = vector.multi_reduction <add>, %411, %cst_140 [1] : vector<2x3x1xf32> to vector<2x1xf32>
    %413 = vector.shape_cast %412 : vector<2x1xf32> to vector<2x1x1xf32>
    %414 = vector.extract_strided_slice %413 {offsets = [0, 0, 0], sizes = [1, 1, 1], strides = [1, 1, 1]} : vector<2x1x1xf32> to vector<1x1x1xf32>
    %415 = vector.shape_cast %414 : vector<1x1x1xf32> to vector<1x1xf32>
    %416 = vector.extract_strided_slice %413 {offsets = [1, 0, 0], sizes = [1, 1, 1], strides = [1, 1, 1]} : vector<2x1x1xf32> to vector<1x1x1xf32>
    %417 = vector.shape_cast %416 : vector<1x1x1xf32> to vector<1x1xf32>
    %418 = arith.addf %415, %417 : vector<1x1xf32>
    %cst_141 = arith.constant 0.166666672 : f32
    %419 = vector.broadcast %cst_141 : f32 to vector<1x1xf32>
    %420 = arith.mulf %418, %419 : vector<1x1xf32>
    %c0_142 = arith.constant 0 : index
    %c0_143 = arith.constant 0 : index
    %421 = vector.load %arg5[%c0_142, %c0_143] : memref<2x16xf32, #tpu.memory_space<vmem>>, vector<2x16xf32>
    %422 = tpu.iota {dimensions = array<i32: 1>} : vector<2x16xi32>
    %c3_i32_144 = arith.constant 3 : i32
    %423 = vector.broadcast %c3_i32_144 : i32 to vector<2x16xi32>
    %424 = arith.cmpi slt, %422, %423 : vector<2x16xi32>
    %cst_145 = arith.constant 3.37153649 : f32
    %425 = vector.broadcast %cst_145 : f32 to vector<2x16xf32>
    %426 = arith.maximumf %421, %425 : vector<2x16xf32>
    %cst_146 = arith.constant 0.000000e+00 : f32
    %427 = vector.broadcast %cst_146 : f32 to vector<2x16xf32>
    %428 = arith.select %424, %426, %427 : vector<2x16xi1>, vector<2x16xf32>
    %cst_147 = arith.constant dense<0.000000e+00> : vector<2xf32>
    %429 = vector.multi_reduction <add>, %428, %cst_147 [1] : vector<2x16xf32> to vector<2xf32>
    %430 = vector.shape_cast %429 : vector<2xf32> to vector<2x1xf32>
    %cst_148 = arith.constant dense<0.000000e+00> : vector<1xf32>
    %431 = vector.multi_reduction <add>, %430, %cst_148 [0] : vector<2x1xf32> to vector<1xf32>
    %432 = vector.shape_cast %431 : vector<1xf32> to vector<1x1xf32>
    %cst_149 = arith.constant 0.166666672 : f32
    %433 = vector.broadcast %cst_149 : f32 to vector<1x1xf32>
    %434 = arith.mulf %432, %433 : vector<1x1xf32>
    %435 = tpu.iota {dimensions = array<i32: 1>} : vector<1x8xi32>
    %c0_i32_150 = arith.constant 0 : i32
    %436 = vector.broadcast %c0_i32_150 : i32 to vector<1x8xi32>
    %437 = arith.cmpi eq, %435, %436 : vector<1x8xi32>
    %cst_151 = arith.constant 0.000000e+00 : f32
    %438 = vector.broadcast %cst_151 : f32 to vector<1x8xf32>
    %439 = vector.shape_cast %263 : vector<1x1xf32> to vector<1x1xf32>
    %440 = vector.broadcast %439 : vector<1x1xf32> to vector<1x8xf32>
    %441 = arith.select %437, %440, %438 : vector<1x8xi1>, vector<1x8xf32>
    %c1_i32_152 = arith.constant 1 : i32
    %442 = vector.broadcast %c1_i32_152 : i32 to vector<1x8xi32>
    %443 = arith.cmpi eq, %435, %442 : vector<1x8xi32>
    %444 = vector.shape_cast %281 : vector<1x1xf32> to vector<1x1xf32>
    %445 = vector.broadcast %444 : vector<1x1xf32> to vector<1x8xf32>
    %446 = arith.select %443, %445, %441 : vector<1x8xi1>, vector<1x8xf32>
    %c2_i32_153 = arith.constant 2 : i32
    %447 = vector.broadcast %c2_i32_153 : i32 to vector<1x8xi32>
    %448 = arith.cmpi eq, %435, %447 : vector<1x8xi32>
    %449 = vector.shape_cast %27 : vector<1x1xf32> to vector<1x1xf32>
    %450 = vector.broadcast %449 : vector<1x1xf32> to vector<1x8xf32>
    %451 = arith.select %448, %450, %446 : vector<1x8xi1>, vector<1x8xf32>
    %c3_i32_154 = arith.constant 3 : i32
    %452 = vector.broadcast %c3_i32_154 : i32 to vector<1x8xi32>
    %453 = arith.cmpi eq, %435, %452 : vector<1x8xi32>
    %454 = vector.shape_cast %296 : vector<1x1xf32> to vector<1x1xf32>
    %455 = vector.broadcast %454 : vector<1x1xf32> to vector<1x8xf32>
    %456 = arith.select %453, %455, %451 : vector<1x8xi1>, vector<1x8xf32>
    %c4_i32 = arith.constant 4 : i32
    %457 = vector.broadcast %c4_i32 : i32 to vector<1x8xi32>
    %458 = arith.cmpi eq, %435, %457 : vector<1x8xi32>
    %459 = vector.shape_cast %420 : vector<1x1xf32> to vector<1x1xf32>
    %460 = vector.broadcast %459 : vector<1x1xf32> to vector<1x8xf32>
    %461 = arith.select %458, %460, %456 : vector<1x8xi1>, vector<1x8xf32>
    %c5_i32 = arith.constant 5 : i32
    %462 = vector.broadcast %c5_i32 : i32 to vector<1x8xi32>
    %463 = arith.cmpi eq, %435, %462 : vector<1x8xi32>
    %464 = vector.shape_cast %434 : vector<1x1xf32> to vector<1x1xf32>
    %465 = vector.broadcast %464 : vector<1x1xf32> to vector<1x8xf32>
    %466 = arith.select %463, %465, %461 : vector<1x8xi1>, vector<1x8xf32>
    %c0_155 = arith.constant 0 : index
    %c0_156 = arith.constant 0 : index
    %467 = vector.load %arg6[%c0_155, %c0_156] : memref<1x8xf32, #tpu.memory_space<vmem>>, vector<1x8xf32>
    tpu.vector_store %arg6[%c0_155, %c0_156], %466 {strides = array<i32>} : memref<1x8xf32, #tpu.memory_space<vmem>>, vector<1x8xf32>,
    return
  }
}

</mosaic_0001>

<llo_original>
// kernel: set_criterion_forward.1
$region0: #{set_criterion_forward.1}
  #allocation0 [shape = 'u32[]', space=smem, size = 0x4, offset = 0x4, fixed_abs, tag = 'smem constant byte address 0x4 - core index']
  #allocation1 [shape = 'u32[144,128]{1,0:T(1,128)}', space=vmem, size = 0x12000, scoped, tag = 'internal scratch']
  %s0 = inlined_call_operand.vmem [shape: f32[2,8,16], index: 0, kind: input, shape index: {}]
  %s1 = inlined_call_operand.vmem [shape: f32[1,8,1], index: 1, kind: input, shape index: {}]
  %s2 = inlined_call_operand.vmem [shape: s32[2,1,3], index: 2, kind: input, shape index: {}]
  %s3 = inlined_call_operand.vmem [shape: f32[2,16,4], index: 3, kind: input, shape index: {}]
  %s4 = inlined_call_operand.vmem [shape: f32[2,3,4], index: 4, kind: input, shape index: {}]
  %s5 = inlined_call_operand.vmem [shape: f32[2,16], index: 5, kind: input, shape index: {}]
  %s6 = inlined_call_operand.vmem [shape: f32[1,8], index: 6, kind: output, shape index: {}]
  %s7 = sld [smem:[#allocation0]]
  $region34: #{set_criterion_forward.1} parent=0
    _
  %s9 = ssub.s32 1, %s7
  %s10 = scalar_select 0, %s9, %s7
  // Predicated region
  $region2: #{set_criterion_forward.1} parent=0 // pred_check
    _
  $region3: #{set_criterion_forward.1} parent=0 // pred_check_branch
    %12 = sbr.rel (0) target = $region5
  $region4: #{set_criterion_forward.1} parent=0 // pred_region
    _
  $region5: #{set_criterion_forward.1} parent=0 // pred_fallthru
    _
  // Predicated region
  $region6: #{set_criterion_forward.1} parent=0 // pred_check
    _
  $region7: #{set_criterion_forward.1} parent=0 // pred_check_branch
    %14 = sbr.rel (0) target = $region9
  $region8: #{set_criterion_forward.1} parent=0 // pred_region
    _
  $region9: #{set_criterion_forward.1} parent=0 // pred_fallthru
    _
  // Predicated region
  $region10: #{set_criterion_forward.1} parent=0 // pred_check
    _
  $region11: #{set_criterion_forward.1} parent=0 // pred_check_branch
    %16 = sbr.rel (0) target = $region13
  $region12: #{set_criterion_forward.1} parent=0 // pred_region
    _
  $region13: #{set_criterion_forward.1} parent=0 // pred_fallthru
    _
  // Predicated region
  $region14: #{set_criterion_forward.1} parent=0 // pred_check
    _
  $region15: #{set_criterion_forward.1} parent=0 // pred_check_branch
    %18 = sbr.rel (0) target = $region17
  $region16: #{set_criterion_forward.1} parent=0 // pred_region
    _
  $region17: #{set_criterion_forward.1} parent=0 // pred_fallthru
    _
  // Predicated region
  $region18: #{set_criterion_forward.1} parent=0 // pred_check
    _
  $region19: #{set_criterion_forward.1} parent=0 // pred_check_branch
    %20 = sbr.rel (0) target = $region21
  $region20: #{set_criterion_forward.1} parent=0 // pred_region
    _
  $region21: #{set_criterion_forward.1} parent=0 // pred_fallthru
    _
  // Predicated region
  $region22: #{set_criterion_forward.1} parent=0 // pred_check
    _
  $region23: #{set_criterion_forward.1} parent=0 // pred_check_branch
    %22 = sbr.rel (0) target = $region25
  $region24: #{set_criterion_forward.1} parent=0 // pred_region
    _
  $region25: #{set_criterion_forward.1} parent=0 // pred_fallthru
    _
  %v23 = vld [vmem:[%s0] sm:$0xff]
  %v24 = vld [vmem:[%s0 + $0x8] sm:$0xff]
  %v25 = vld [vmem:[%s1] sm:$0xff]
  %v26 = vlaneseq
  %v27 = vshrl.u32 %v26, 7
  %vm28 = vcmp.eq.s32.totalorder %v27, 7
  %v29 = vsel %vm28, %v23, 0.0
  %v30 = vsel %vm28, %v24, 0.0
  %vm31 = vcmask 130048
  %v32 = vsel %vm31, %v29, 0.0
  %v33 = vrot.slane %v32, 4
  %v34 = vadd.f32 %v32, %v33
  %v35 = vrot.slane %v34, 2
  %v36 = vadd.f32 %v34, %v35
  %v37 = vrot.slane %v36, 1
  %v38 = vadd.f32 %v36, %v37
  %v39 = vsel %vm31, %v30, 0.0
  %v40 = vrot.slane %v39, 4
  %v41 = vadd.f32 %v39, %v40
  %v42 = vrot.slane %v41, 2
  %v43 = vadd.f32 %v41, %v42
  %v44 = vrot.slane %v43, 1
  %v45 = vadd.f32 %v43, %v44
  %v46 = vsel %vm28, -1e+30, %v23
  %v47 = vsel %vm28, -1e+30, %v24
  %v48 = vsel %vm31, %v46, -inf
  %v49 = vrot.slane %v48, 4
  %v50 = vmax.f32 %v48, %v49
  %v51 = vrot.slane %v50, 2
  %v52 = vmax.f32 %v50, %v51
  %v53 = vrot.slane %v52, 1
  %v54 = vmax.f32 %v52, %v53
  %v55 = vsel %vm31, %v47, -inf
  %v56 = vrot.slane %v55, 4
  %v57 = vmax.f32 %v55, %v56
  %v58 = vrot.slane %v57, 2
  %v59 = vmax.f32 %v57, %v58
  %v60 = vrot.slane %v59, 1
  %v61 = vmax.f32 %v59, %v60
  %vm62 = vcmp.ge.f32.partialorder %v54, %v38
  %vm63 = vcmp.ge.f32.partialorder %v61, %v45
  %v64 = vsel %vm62, 1, 0
  %v65 = vsel %vm63, 1, 0
  %v66 = vcvt.s32.f32 %v64
  %v67 = vcvt.s32.f32 %v65
  %v68 = vsel %vm31, %v66, 0.0
  %69 = vadd.xlane.f32.xlu0 %v68
  %v70 = vpop.xlane.xlu0 %69
  %v71 = vsel %vm31, %v67, 0.0
  %72 = vadd.xlane.f32.xlu0 %v71
  %v73 = vpop.xlane.xlu0 %72
  %v74 = vsub.f32 %v70, 3.0
  %v75 = vsub.f32 %v73, 3.0
  %v76 = vand.u32 2147483647, %v74
  %v77 = vand.u32 2147483647, %v75
  %v78 = vadd.f32 %v76, %v77
  %v79 = vmul.f32 %v78, 0.5
  %81 = vset.pattern.permute.xlu0 0
  %82 = vperm.xlu0 %81, %v25
  %v83 = vpop.permute.xlu0 %82
  %v85 = vadd.f32 %v23, %v83
  %v86 = vadd.f32 %v24, %v83
  %v87 = vmax.f32 %v85, 0.0
  %v88 = vmax.f32 %v86, 0.0
  %v89 = vand.u32 2147483647, %v85
  %v90 = vand.u32 2147483647, %v86
  %v91 = vsub.f32 0.0, %v89
  %v92 = vsub.f32 0.0, %v90
  %v93 = vmul.f32 %v91, 1.442695
  %v94 = vpow.pop %v93
  %v95 = vmul.f32 %v92, 1.442695
  %v96 = vpow.pop %v95
  %v97 = vadd.f32 %v94, 1.0
  %v98 = vadd.f32 %v96, 1.0
  %v99 = vlog2.pop %v97
  %v100 = vmul.f32 %v99, 0.6931472
  %v101 = vlog2.pop %v98
  %v102 = vmul.f32 %v101, 0.6931472
  %v103 = vadd.f32 %v87, %v100
  %v104 = vadd.f32 %v88, %v102
  %v105 = vadd.f32 %v103, 1.0
  %v106 = vadd.f32 %v104, 1.0
  %v107 = vsel %vm31, %v105, 0.0
  %v108 = vrot.slane %v107, 4
  %v109 = vadd.f32 %v107, %v108
  %v110 = vrot.slane %v109, 2
  %v111 = vadd.f32 %v109, %v110
  %v112 = vrot.slane %v111, 1
  %v113 = vadd.f32 %v111, %v112
  %v114 = vsel %vm31, %v106, 0.0
  %v115 = vrot.slane %v114, 4
  %v116 = vadd.f32 %v114, %v115
  %v117 = vrot.slane %v116, 2
  %v118 = vadd.f32 %v116, %v117
  %v119 = vrot.slane %v118, 1
  %v120 = vadd.f32 %v118, %v119
  %v121 = vsel %vm28, %v105, 0.0
  %v122 = vsel %vm28, %v106, 0.0
  %v123 = vsel %vm31, %v121, 0.0
  %v124 = vrot.slane %v123, 4
  %v125 = vadd.f32 %v123, %v124
  %v126 = vrot.slane %v125, 2
  %v127 = vadd.f32 %v125, %v126
  %v128 = vrot.slane %v127, 1
  %v129 = vadd.f32 %v127, %v128
  %v130 = vsel %vm31, %v122, 0.0
  %v131 = vrot.slane %v130, 4
  %v132 = vadd.f32 %v130, %v131
  %v133 = vrot.slane %v132, 2
  %v134 = vadd.f32 %v132, %v133
  %v135 = vrot.slane %v134, 1
  %v136 = vadd.f32 %v134, %v135
  %vm137 = vcmp.eq.s32.totalorder %v27, 0
  %v138 = vsel %vm137, %v113, %v129
  %v139 = vsel %vm137, %v120, %v136
  %vm140 = vcmp.lt.f32.partialorder %v138, 7.0
  %vm141 = vcmp.lt.f32.partialorder %v139, 7.0
  %v142 = vrcp.pop %v138
  %v143 = vrcp.pop %v139
  %v144 = vsel %vm140, %v142, 0.0
  %v145 = vsel %vm141, %v143, 0.0
  %v146 = vsub.f32 0.0, %v144
  %v147 = vsub.f32 0.0, %v145
  %v148 = vadd.f32 %v138, 1.0
  %v149 = vadd.f32 %v139, 1.0
  %v150 = vsel %vm140, %v148, %v138
  %v151 = vsel %vm141, %v149, %v139
  %vm152 = vcmp.lt.f32.partialorder %v150, 7.0
  %vm153 = vcmp.lt.f32.partialorder %v151, 7.0
  %v154 = vrcp.pop %v150
  %v155 = vrcp.pop %v151
  %v156 = vsel %vm152, %v154, 0.0
  %v157 = vsel %vm153, %v155, 0.0
  %v158 = vsub.f32 %v146, %v156
  %v159 = vsub.f32 %v147, %v157
  %v160 = vadd.f32 %v150, 1.0
  %v161 = vadd.f32 %v151, 1.0
  %v162 = vsel %vm152, %v160, %v150
  %v163 = vsel %vm153, %v161, %v151
  %vm164 = vcmp.lt.f32.partialorder %v162, 7.0
  %vm165 = vcmp.lt.f32.partialorder %v163, 7.0
  %v166 = vrcp.pop %v162
  %v167 = vrcp.pop %v163
  %v168 = vsel %vm164, %v166, 0.0
  %v169 = vsel %vm165, %v167, 0.0
  %v170 = vsub.f32 %v158, %v168
  %v171 = vsub.f32 %v159, %v169
  %v172 = vadd.f32 %v162, 1.0
  %v173 = vadd.f32 %v163, 1.0
  %v174 = vsel %vm164, %v172, %v162
  %v175 = vsel %vm165, %v173, %v163
  %vm176 = vcmp.lt.f32.partialorder %v174, 7.0
  %vm177 = vcmp.lt.f32.partialorder %v175, 7.0
  %v178 = vrcp.pop %v174
  %v179 = vrcp.pop %v175
  %v180 = vsel %vm176, %v178, 0.0
  %v181 = vsel %vm177, %v179, 0.0
  %v182 = vsub.f32 %v170, %v180
  %v183 = vsub.f32 %v171, %v181
  %v184 = vadd.f32 %v174, 1.0
  %v185 = vadd.f32 %v175, 1.0
  %v186 = vsel %vm176, %v184, %v174
  %v187 = vsel %vm177, %v185, %v175
  %vm188 = vcmp.lt.f32.partialorder %v186, 7.0
  %vm189 = vcmp.lt.f32.partialorder %v187, 7.0
  %v190 = vrcp.pop %v186
  %v191 = vrcp.pop %v187
  %v192 = vsel %vm188, %v190, 0.0
  %v193 = vsel %vm189, %v191, 0.0
  %v194 = vsub.f32 %v182, %v192
  %v195 = vsub.f32 %v183, %v193
  %v196 = vadd.f32 %v186, 1.0
  %v197 = vadd.f32 %v187, 1.0
  %v198 = vsel %vm188, %v196, %v186
  %v199 = vsel %vm189, %v197, %v187
  %vm200 = vcmp.lt.f32.partialorder %v198, 7.0
  %vm201 = vcmp.lt.f32.partialorder %v199, 7.0
  %v202 = vrcp.pop %v198
  %v203 = vrcp.pop %v199
  %v204 = vsel %vm200, %v202, 0.0
  %v205 = vsel %vm201, %v203, 0.0
  %v206 = vsub.f32 %v194, %v204
  %v207 = vsub.f32 %v195, %v205
  %v208 = vadd.f32 %v198, 1.0
  %v209 = vadd.f32 %v199, 1.0
  %v210 = vsel %vm200, %v208, %v198
  %v211 = vsel %vm201, %v209, %v199
  %v212 = vrcp.pop %v210
  %v213 = vrcp.pop %v211
  %v214 = vmul.f32 %v212, %v212
  %v215 = vmul.f32 %v213, %v213
  %v216 = vmul.f32 %v214, 0.003968254
  %v217 = vmul.f32 %v215, 0.003968254
  %v218 = vsub.f32 0.008333334, %v216
  %v219 = vsub.f32 0.008333334, %v217
  %v220 = vmul.f32 %v214, %v218
  %v221 = vmul.f32 %v215, %v219
  %v222 = vsub.f32 0.083333336, %v220
  %v223 = vsub.f32 0.083333336, %v221
  %v224 = vmul.f32 %v214, %v222
  %v225 = vmul.f32 %v215, %v223
  %v226 = vlog2.pop %v210
  %v227 = vmul.f32 %v226, 0.6931472
  %v228 = vlog2.pop %v211
  %v229 = vmul.f32 %v228, 0.6931472
  %v230 = vmul.f32 %v212, 0.5
  %v231 = vmul.f32 %v213, 0.5
  %v232 = vsub.f32 %v227, %v230
  %v233 = vsub.f32 %v229, %v231
  %v234 = vsub.f32 %v232, %v224
  %v235 = vsub.f32 %v233, %v225
  %v236 = vadd.f32 %v234, %v206
  %v237 = vadd.f32 %v235, %v207
  %v238 = vsel %vm137, 1.0, -1.0
  %v239 = vmul.f32 %v236, %v238
  %v240 = vmul.f32 %v237, %v238
  %vm241 = vcmask 123904
  %v242 = vsel %vm241, %v239, 0.0
  %243 = vadd.xlane.f32.xlu0 %v242
  %v244 = vpop.xlane.xlu0 %243
  %v245 = vsel %vm241, %v240, 0.0
  %246 = vadd.xlane.f32.xlu0 %v245
  %v247 = vpop.xlane.xlu0 %246
  %vm248 = vcmask 1041408
  %v249 = vsel %vm248, %v244, 0.0
  %v250 = vrot.slane %v249, 4
  %v251 = vadd.f32 %v249, %v250
  %v252 = vrot.slane %v251, 2
  %v253 = vadd.f32 %v251, %v252
  %v254 = vrot.slane %v253, 1
  %v255 = vadd.f32 %v253, %v254
  %v256 = vsel %vm248, %v247, 0.0
  %v257 = vrot.slane %v256, 4
  %v258 = vadd.f32 %v256, %v257
  %v259 = vrot.slane %v258, 2
  %v260 = vadd.f32 %v258, %v259
  %v261 = vrot.slane %v260, 1
  %v262 = vadd.f32 %v260, %v261
  %v263 = vadd.f32 %v255, %v262
  %v264 = vld [vmem:[%s2] sm:$0x1]
  %v265 = vld [vmem:[%s2 + $0x1] sm:$0x1]
  %v266 = vlaneseq
  %v267 = vshrl.u32 %v266, 7
  %v268 = vsub.s32 0, %v267
  %v269 = vrot.slane %v264, %v268
  %v270 = vlaneseq
  %v271 = vshrl.u32 %v270, 7
  %v272 = vsub.s32 0, %v271
  %v273 = vrot.slane %v265, %v272
  %vm274 = vcmp.eq.s32.totalorder %v27, %v269
  %vm275 = vcmp.eq.s32.totalorder %v27, %v273
  %v276 = vsel %vm274, %v105, 0.0
  %v277 = vsel %vm275, %v106, 0.0
  %vm278 = vcmask 23552
  %v279 = vsel %vm278, %v276, 0.0
  %v280 = vrot.slane %v279, 4
  %v281 = vadd.f32 %v279, %v280
  %v282 = vrot.slane %v281, 2
  %v283 = vadd.f32 %v281, %v282
  %v284 = vrot.slane %v283, 1
  %v285 = vadd.f32 %v283, %v284
  %v286 = vsel %vm278, %v277, 0.0
  %v287 = vrot.slane %v286, 4
  %v288 = vadd.f32 %v286, %v287
  %v289 = vrot.slane %v288, 2
  %v290 = vadd.f32 %v288, %v289
  %v291 = vrot.slane %v290, 1
  %v292 = vadd.f32 %v290, %v291
  %v293 = vsel %vm278, %v121, 0.0
  %v294 = vrot.slane %v293, 4
  %v295 = vadd.f32 %v293, %v294
  %v296 = vrot.slane %v295, 2
  %v297 = vadd.f32 %v295, %v296
  %v298 = vrot.slane %v297, 1
  %v299 = vadd.f32 %v297, %v298
  %v300 = vsel %vm278, %v122, 0.0
  %v301 = vrot.slane %v300, 4
  %v302 = vadd.f32 %v300, %v301
  %v303 = vrot.slane %v302, 2
  %v304 = vadd.f32 %v302, %v303
  %v305 = vrot.slane %v304, 1
  %v306 = vadd.f32 %v304, %v305
  %v307 = vsel %vm137, %v299, %v285
  %v308 = vsel %vm137, %v306, %v292
  %vm309 = vcmp.lt.f32.partialorder %v307, 7.0
  %vm310 = vcmp.lt.f32.partialorder %v308, 7.0
  %v311 = vrcp.pop %v307
  %v312 = vrcp.pop %v308
  %v313 = vsel %vm309, %v311, 0.0
  %v314 = vsel %vm310, %v312, 0.0
  %v315 = vsub.f32 0.0, %v313
  %v316 = vsub.f32 0.0, %v314
  %v317 = vadd.f32 %v307, 1.0
  %v318 = vadd.f32 %v308, 1.0
  %v319 = vsel %vm309, %v317, %v307
  %v320 = vsel %vm310, %v318, %v308
  %vm321 = vcmp.lt.f32.partialorder %v319, 7.0
  %vm322 = vcmp.lt.f32.partialorder %v320, 7.0
  %v323 = vrcp.pop %v319
  %v324 = vrcp.pop %v320
  %v325 = vsel %vm321, %v323, 0.0
  %v326 = vsel %vm322, %v324, 0.0
  %v327 = vsub.f32 %v315, %v325
  %v328 = vsub.f32 %v316, %v326
  %v329 = vadd.f32 %v319, 1.0
  %v330 = vadd.f32 %v320, 1.0
  %v331 = vsel %vm321, %v329, %v319
  %v332 = vsel %vm322, %v330, %v320
  %vm333 = vcmp.lt.f32.partialorder %v331, 7.0
  %vm334 = vcmp.lt.f32.partialorder %v332, 7.0
  %v335 = vrcp.pop %v331
  %v336 = vrcp.pop %v332
  %v337 = vsel %vm333, %v335, 0.0
  %v338 = vsel %vm334, %v336, 0.0
  %v339 = vsub.f32 %v327, %v337
  %v340 = vsub.f32 %v328, %v338
  %v341 = vadd.f32 %v331, 1.0
  %v342 = vadd.f32 %v332, 1.0
  %v343 = vsel %vm333, %v341, %v331
  %v344 = vsel %vm334, %v342, %v332
  %vm345 = vcmp.lt.f32.partialorder %v343, 7.0
  %vm346 = vcmp.lt.f32.partialorder %v344, 7.0
  %v347 = vrcp.pop %v343
  %v348 = vrcp.pop %v344
  %v349 = vsel %vm345, %v347, 0.0
  %v350 = vsel %vm346, %v348, 0.0
  %v351 = vsub.f32 %v339, %v349
  %v352 = vsub.f32 %v340, %v350
  %v353 = vadd.f32 %v343, 1.0
  %v354 = vadd.f32 %v344, 1.0
  %v355 = vsel %vm345, %v353, %v343
  %v356 = vsel %vm346, %v354, %v344
  %vm357 = vcmp.lt.f32.partialorder %v355, 7.0
  %vm358 = vcmp.lt.f32.partialorder %v356, 7.0
  %v359 = vrcp.pop %v355
  %v360 = vrcp.pop %v356
  %v361 = vsel %vm357, %v359, 0.0
  %v362 = vsel %vm358, %v360, 0.0
  %v363 = vsub.f32 %v351, %v361
  %v364 = vsub.f32 %v352, %v362
  %v365 = vadd.f32 %v355, 1.0
  %v366 = vadd.f32 %v356, 1.0
  %v367 = vsel %vm357, %v365, %v355
  %v368 = vsel %vm358, %v366, %v356
  %vm369 = vcmp.lt.f32.partialorder %v367, 7.0
  %vm370 = vcmp.lt.f32.partialorder %v368, 7.0
  %v371 = vrcp.pop %v367
  %v372 = vrcp.pop %v368
  %v373 = vsel %vm369, %v371, 0.0
  %v374 = vsel %vm370, %v372, 0.0
  %v375 = vsub.f32 %v363, %v373
  %v376 = vsub.f32 %v364, %v374
  %v377 = vadd.f32 %v367, 1.0
  %v378 = vadd.f32 %v368, 1.0
  %v379 = vsel %vm369, %v377, %v367
  %v380 = vsel %vm370, %v378, %v368
  %v381 = vrcp.pop %v379
  %v382 = vrcp.pop %v380
  %v383 = vmul.f32 %v381, %v381
  %v384 = vmul.f32 %v382, %v382
  %v385 = vmul.f32 %v383, 0.003968254
  %v386 = vmul.f32 %v384, 0.003968254
  %v387 = vsub.f32 0.008333334, %v385
  %v388 = vsub.f32 0.008333334, %v386
  %v389 = vmul.f32 %v383, %v387
  %v390 = vmul.f32 %v384, %v388
  %v391 = vsub.f32 0.083333336, %v389
  %v392 = vsub.f32 0.083333336, %v390
  %v393 = vmul.f32 %v383, %v391
  %v394 = vmul.f32 %v384, %v392
  %v395 = vlog2.pop %v379
  %v396 = vmul.f32 %v395, 0.6931472
  %v397 = vlog2.pop %v380
  %v398 = vmul.f32 %v397, 0.6931472
  %v399 = vmul.f32 %v381, 0.5
  %v400 = vmul.f32 %v382, 0.5
  %v401 = vsub.f32 %v396, %v399
  %v402 = vsub.f32 %v398, %v400
  %v403 = vsub.f32 %v401, %v393
  %v404 = vsub.f32 %v402, %v394
  %v405 = vadd.f32 %v403, %v375
  %v406 = vadd.f32 %v404, %v376
  %v407 = vmul.f32 %v405, %v238
  %v408 = vmul.f32 %v406, %v238
  %vm409 = vcmask 17408
  %v410 = vsel %vm409, %v407, 0.0
  %411 = vadd.xlane.f32.xlu0 %v410
  %v412 = vpop.xlane.xlu0 %411
  %v413 = vsel %vm409, %v408, 0.0
  %414 = vadd.xlane.f32.xlu0 %v413
  %v415 = vpop.xlane.xlu0 %414
  %v416 = vsel %vm248, %v412, 0.0
  %v417 = vrot.slane %v416, 4
  %v418 = vadd.f32 %v416, %v417
  %v419 = vrot.slane %v418, 2
  %v420 = vadd.f32 %v418, %v419
  %v421 = vrot.slane %v420, 1
  %v422 = vadd.f32 %v420, %v421
  %v423 = vsel %vm248, %v415, 0.0
  %v424 = vrot.slane %v423, 4
  %v425 = vadd.f32 %v423, %v424
  %v426 = vrot.slane %v425, 2
  %v427 = vadd.f32 %v425, %v426
  %v428 = vrot.slane %v427, 1
  %v429 = vadd.f32 %v427, %v428
  %v430 = vadd.f32 %v422, %v429
  %v431 = vadd.f32 %v263, %v430
  %v432 = vmul.f32 %v431, 0.03125
  %v433 = vsel %vm278, %v105, -inf
  %v434 = vrot.slane %v433, 4
  %v435 = vmax.f32 %v433, %v434
  %v436 = vrot.slane %v435, 2
  %v437 = vmax.f32 %v435, %v436
  %v438 = vrot.slane %v437, 1
  %v439 = vmax.f32 %v437, %v438
  %v440 = vsel %vm278, %v106, -inf
  %v441 = vrot.slane %v440, 4
  %v442 = vmax.f32 %v440, %v441
  %v443 = vrot.slane %v442, 2
  %v444 = vmax.f32 %v442, %v443
  %v445 = vrot.slane %v444, 1
  %v446 = vmax.f32 %v444, %v445
  %vm447 = vcmp.ge.f32.partialorder %v285, %v439
  %vm448 = vcmp.ge.f32.partialorder %v292, %v446
  %v449 = vsel %vm447, 1, 0
  %v450 = vsel %vm448, 1, 0
  %v451 = vcvt.s32.f32 %v449
  %v452 = vcvt.s32.f32 %v450
  %v453 = vsel %vm278, %v451, 0.0
  %454 = vadd.xlane.f32.xlu0 %v453
  %v455 = vpop.xlane.xlu0 %454
  %v456 = vsel %vm278, %v452, 0.0
  %457 = vadd.xlane.f32.xlu0 %v456
  %v458 = vpop.xlane.xlu0 %457
  %v459 = vadd.f32 %v455, 0.0
  %v460 = vadd.f32 %v458, 0.0
  %v461 = vadd.f32 %v459, %v460
  %v462 = vmul.f32 %v461, 16.666666
  %v463 = vsub.f32 100.0, %v462
  %v464 = vld [vmem:[%s3] sm:$0x7]
  %v465 = vld [vmem:[%s3 + $0x10] sm:$0x7]
  %v466 = vld [vmem:[%s4] sm:$0x7]
  %v467 = vld [vmem:[%s4 + $0x4] sm:$0x7]
  %v468 = vsub.f32 %v464, %v466
  %v469 = vsub.f32 %v465, %v467
  %v470 = vand.u32 2147483647, %v468
  %v471 = vand.u32 2147483647, %v469
  %vm472 = vcmask 26624
  %v473 = vsel %vm472, %v470, 0.0
  %474 = vadd.xlane.f32.xlu0 %v473
  %v475 = vpop.xlane.xlu0 %474
  %v476 = vsel %vm472, %v471, 0.0
  %477 = vadd.xlane.f32.xlu0 %v476
  %v478 = vpop.xlane.xlu0 %477
  %vm479 = vcmask 1042432
  %v480 = vsel %vm479, %v475, 0.0
  %v481 = vrot.slane %v480, 4
  %v482 = vadd.f32 %v480, %v481
  %v483 = vrot.slane %v482, 2
  %v484 = vadd.f32 %v482, %v483
  %v485 = vrot.slane %v484, 1
  %v486 = vadd.f32 %v484, %v485
  %v487 = vsel %vm479, %v478, 0.0
  %v488 = vrot.slane %v487, 4
  %v489 = vadd.f32 %v487, %v488
  %v490 = vrot.slane %v489, 2
  %v491 = vadd.f32 %v489, %v490
  %v492 = vrot.slane %v491, 1
  %v493 = vadd.f32 %v491, %v492
  %v494 = vadd.f32 %v486, %v493
  %v495 = vmul.f32 %v494, 0.16666667
  %v496 = vlaneseq
  %v497 = vand.u32 %v496, 127
  %vm498 = vcmp.eq.s32.totalorder %v497, 0
  %v499 = vsel %vm498, %v464, 0.0
  %v500 = vsel %vm498, %v465, 0.0
  %v501 = vsel %vm472, %v499, 0.0
  %502 = vadd.xlane.f32.xlu0 %v501
  %v503 = vpop.xlane.xlu0 %502
  %v504 = vsel %vm472, %v500, 0.0
  %505 = vadd.xlane.f32.xlu0 %v504
  %v506 = vpop.xlane.xlu0 %505
  %vm507 = vcmp.eq.s32.totalorder %v497, 1
  %v508 = vsel %vm507, %v464, 0.0
  %v509 = vsel %vm507, %v465, 0.0
  %v510 = vsel %vm472, %v508, 0.0
  %511 = vadd.xlane.f32.xlu0 %v510
  %v512 = vpop.xlane.xlu0 %511
  %v513 = vsel %vm472, %v509, 0.0
  %514 = vadd.xlane.f32.xlu0 %v513
  %v515 = vpop.xlane.xlu0 %514
  %vm516 = vcmp.eq.s32.totalorder %v497, 2
  %v517 = vsel %vm516, %v464, 0.0
  %v518 = vsel %vm516, %v465, 0.0
  %v519 = vsel %vm472, %v517, 0.0
  %520 = vadd.xlane.f32.xlu0 %v519
  %v521 = vpop.xlane.xlu0 %520
  %v522 = vsel %vm472, %v518, 0.0
  %523 = vadd.xlane.f32.xlu0 %v522
  %v524 = vpop.xlane.xlu0 %523
  %vm525 = vcmp.eq.s32.totalorder %v497, 3
  %v526 = vsel %vm525, %v464, 0.0
  %v527 = vsel %vm525, %v465, 0.0
  %v528 = vsel %vm472, %v526, 0.0
  %529 = vadd.xlane.f32.xlu0 %v528
  %v530 = vpop.xlane.xlu0 %529
  %v531 = vsel %vm472, %v527, 0.0
  %532 = vadd.xlane.f32.xlu0 %v531
  %v533 = vpop.xlane.xlu0 %532
  %v534 = vsel %vm498, %v466, 0.0
  %v535 = vsel %vm498, %v467, 0.0
  %v536 = vsel %vm472, %v534, 0.0
  %537 = vadd.xlane.f32.xlu0 %v536
  %v538 = vpop.xlane.xlu0 %537
  %v539 = vsel %vm472, %v535, 0.0
  %540 = vadd.xlane.f32.xlu0 %v539
  %v541 = vpop.xlane.xlu0 %540
  %v542 = vsel %vm507, %v466, 0.0
  %v543 = vsel %vm507, %v467, 0.0
  %v544 = vsel %vm472, %v542, 0.0
  %545 = vadd.xlane.f32.xlu0 %v544
  %v546 = vpop.xlane.xlu0 %545
  %v547 = vsel %vm472, %v543, 0.0
  %548 = vadd.xlane.f32.xlu0 %v547
  %v549 = vpop.xlane.xlu0 %548
  %v550 = vsel %vm516, %v466, 0.0
  %v551 = vsel %vm516, %v467, 0.0
  %v552 = vsel %vm472, %v550, 0.0
  %553 = vadd.xlane.f32.xlu0 %v552
  %v554 = vpop.xlane.xlu0 %553
  %v555 = vsel %vm472, %v551, 0.0
  %556 = vadd.xlane.f32.xlu0 %v555
  %v557 = vpop.xlane.xlu0 %556
  %v558 = vsel %vm525, %v466, 0.0
  %v559 = vsel %vm525, %v467, 0.0
  %v560 = vsel %vm472, %v558, 0.0
  %561 = vadd.xlane.f32.xlu0 %v560
  %v562 = vpop.xlane.xlu0 %561
  %v563 = vsel %vm472, %v559, 0.0
  %564 = vadd.xlane.f32.xlu0 %v563
  %v565 = vpop.xlane.xlu0 %564
  %v566 = vmul.f32 %v521, 0.5
  %v567 = vmul.f32 %v524, 0.5
  %v568 = vsub.f32 %v503, %v566
  %v569 = vsub.f32 %v506, %v567
  %v570 = vmul.f32 %v530, 0.5
  %v571 = vmul.f32 %v533, 0.5
  %v572 = vsub.f32 %v512, %v570
  %v573 = vsub.f32 %v515, %v571
  %v574 = vadd.f32 %v503, %v566
  %v575 = vadd.f32 %v506, %v567
  %v576 = vadd.f32 %v512, %v570
  %v577 = vadd.f32 %v515, %v571
  %v578 = vmul.f32 %v554, 0.5
  %v579 = vmul.f32 %v557, 0.5
  %v580 = vsub.f32 %v538, %v578
  %v581 = vsub.f32 %v541, %v579
  %v582 = vmul.f32 %v562, 0.5
  %v583 = vmul.f32 %v565, 0.5
  %v584 = vsub.f32 %v546, %v582
  %v585 = vsub.f32 %v549, %v583
  %v586 = vadd.f32 %v538, %v578
  %v587 = vadd.f32 %v541, %v579
  %v588 = vadd.f32 %v546, %v582
  %v589 = vadd.f32 %v549, %v583
  %v590 = vsub.f32 %v574, %v568
  %v591 = vsub.f32 %v575, %v569
  %v592 = vsub.f32 %v576, %v572
  %v593 = vsub.f32 %v577, %v573
  %v594 = vmul.f32 %v590, %v592
  %v595 = vmul.f32 %v591, %v593
  %v596 = vsub.f32 %v586, %v580
  %v597 = vsub.f32 %v587, %v581
  %v598 = vsub.f32 %v588, %v584
  %v599 = vsub.f32 %v589, %v585
  %v600 = vmul.f32 %v596, %v598
  %v601 = vmul.f32 %v597, %v599
  %v602 = vmin.f32 %v574, %v586
  %v603 = vmin.f32 %v575, %v587
  %v604 = vmax.f32 %v568, %v580
  %v605 = vmax.f32 %v569, %v581
  %v606 = vsub.f32 %v602, %v604
  %v607 = vsub.f32 %v603, %v605
  %v608 = vmax.f32 %v606, 0.0
  %v609 = vmax.f32 %v607, 0.0
  %v610 = vmin.f32 %v576, %v588
  %v611 = vmin.f32 %v577, %v589
  %v612 = vmax.f32 %v572, %v584
  %v613 = vmax.f32 %v573, %v585
  %v614 = vsub.f32 %v610, %v612
  %v615 = vsub.f32 %v611, %v613
  %v616 = vmax.f32 %v614, 0.0
  %v617 = vmax.f32 %v615, 0.0
  %v618 = vmul.f32 %v608, %v616
  %v619 = vmul.f32 %v609, %v617
  %v620 = vadd.f32 %v594, %v600
  %v621 = vadd.f32 %v595, %v601
  %v622 = vsub.f32 %v620, %v618
  %v623 = vsub.f32 %v621, %v619
  %v624 = vmax.f32 %v622, 1e-07
  %v625 = vmax.f32 %v623, 1e-07
  %v626 = vrcp.pop %v624
  %v627 = vmul.f32 %v618, %v626
  %v628 = vrcp.pop %v625
  %v629 = vmul.f32 %v619, %v628
  %v630 = vmax.f32 %v574, %v586
  %v631 = vmax.f32 %v575, %v587
  %v632 = vmin.f32 %v568, %v580
  %v633 = vmin.f32 %v569, %v581
  %v634 = vsub.f32 %v630, %v632
  %v635 = vsub.f32 %v631, %v633
  %v636 = vmax.f32 %v634, 0.0
  %v637 = vmax.f32 %v635, 0.0
  %v638 = vmax.f32 %v576, %v588
  %v639 = vmax.f32 %v577, %v589
  %v640 = vmin.f32 %v572, %v584
  %v641 = vmin.f32 %v573, %v585
  %v642 = vsub.f32 %v638, %v640
  %v643 = vsub.f32 %v639, %v641
  %v644 = vmax.f32 %v642, 0.0
  %v645 = vmax.f32 %v643, 0.0
  %v646 = vmul.f32 %v636, %v644
  %v647 = vmul.f32 %v637, %v645
  %v648 = vsub.f32 %v646, %v622
  %v649 = vsub.f32 %v647, %v623
  %v650 = vmax.f32 %v646, 1e-07
  %v651 = vmax.f32 %v647, 1e-07
  %v652 = vrcp.pop %v650
  %v653 = vmul.f32 %v648, %v652
  %v654 = vrcp.pop %v651
  %v655 = vmul.f32 %v649, %v654
  %v656 = vsub.f32 %v627, %v653
  %v657 = vsub.f32 %v629, %v655
  %v658 = vsub.f32 1.0, %v656
  %v659 = vsub.f32 1.0, %v657
  %v660 = vadd.f32 %v658, 0.0
  %v661 = vadd.f32 %v659, 0.0
  %v662 = vsel %vm479, %v660, 0.0
  %v663 = vrot.slane %v662, 4
  %v664 = vadd.f32 %v662, %v663
  %v665 = vrot.slane %v664, 2
  %v666 = vadd.f32 %v664, %v665
  %v667 = vrot.slane %v666, 1
  %v668 = vadd.f32 %v666, %v667
  %v669 = vsel %vm479, %v661, 0.0
  %v670 = vrot.slane %v669, 4
  %v671 = vadd.f32 %v669, %v670
  %v672 = vrot.slane %v671, 2
  %v673 = vadd.f32 %v671, %v672
  %v674 = vrot.slane %v673, 1
  %v675 = vadd.f32 %v673, %v674
  %v676 = vadd.f32 %v668, %v675
  %v677 = vmul.f32 %v676, 0.16666667
  %v678 = vld [vmem:[%s5] sm:$0x3]
  %vm679 = vcmp.lt.s32.totalorder %v497, 3
  %v680 = vmax.f32 %v678, 3.3715365
  %v681 = vsel %vm679, %v680, 0.0
  %v682 = vsel %vm241, %v681, 0.0
  %683 = vadd.xlane.f32.xlu0 %v682
  %v684 = vpop.xlane.xlu0 %683
  %v685 = vsel %vm248, %v684, 0.0
  %v686 = vrot.slane %v685, 4
  %v687 = vadd.f32 %v685, %v686
  %v688 = vrot.slane %v687, 2
  %v689 = vadd.f32 %v687, %v688
  %v690 = vrot.slane %v689, 1
  %v691 = vadd.f32 %v689, %v690
  %v692 = vmul.f32 %v691, 0.16666667
  %v693 = vsel %vm498, %v432, 0.0
  %v694 = vsel %vm507, %v463, %v693
  %v695 = vsel %vm516, %v79, %v694
  %v696 = vsel %vm525, %v495, %v695
  %vm697 = vcmp.eq.s32.totalorder %v497, 4
  %v698 = vsel %vm697, %v677, %v696
  %vm699 = vcmp.eq.s32.totalorder %v497, 5
  %v700 = vsel %vm699, %v692, %v698
  %vm701 = vcmask 57344
  %702 = vst.msk [vmem:[%s6] sm:$0x1] %vm701, %v700
  // Predicated region
  $region26: #{set_criterion_forward.1} parent=0 // pred_check
    _
  $region27: #{set_criterion_forward.1} parent=0 // pred_check_branch
    %704 = sbr.rel (0) target = $region29
  $region28: #{set_criterion_forward.1} parent=0 // pred_region
    _
  $region29: #{set_criterion_forward.1} parent=0 // pred_fallthru
    _
  // Predicated region
  $region30: #{set_criterion_forward.1} parent=0 // pred_check
    _
  $region31: #{set_criterion_forward.1} parent=0 // pred_check_branch
    %706 = sbr.rel (0) target = $region33
  $region32: #{set_criterion_forward.1} parent=0 // pred_region
    _
  $region33: #{set_criterion_forward.1} parent=0 // pred_fallthru
    _

</llo_original>
